<compile_context>
chip_gen: v7x
topology: tpu7x:2x2x1
jax: 0.10.0
libtpu: 0.0.40
codegen_flags: <defaults>
</compile_context>

<pallas_src>
import functools

import numpy as np
import jax
import jax.numpy as jnp
from jax.experimental import pallas as pl
from jax.experimental.pallas import tpu as pltpu


# ----------------------- deterministic "parameters" -------------------------

def _hz_to_mel(f):
    return 2595.0 * np.log10(1.0 + f / 700.0)


def _mel_to_hz(m):
    return 700.0 * (10.0 ** (m / 2595.0) - 1.0)


def melscale_fbanks(n_freqs, f_min, f_max, n_mels, sample_rate):
    """torchaudio.functional.melscale_fbanks with mel_scale='htk', norm=None."""
    all_freqs = np.linspace(0.0, sample_rate // 2, n_freqs)
    m_min, m_max = _hz_to_mel(f_min), _hz_to_mel(f_max)
    m_pts = np.linspace(m_min, m_max, n_mels + 2)
    f_pts = _mel_to_hz(m_pts)
    f_diff = f_pts[1:] - f_pts[:-1]
    slopes = f_pts[None, :] - all_freqs[:, None]            # (n_freqs, n_mels+2)
    down = -slopes[:, :-2] / f_diff[:-1]
    up = slopes[:, 2:] / f_diff[1:]
    fb = np.maximum(0.0, np.minimum(down, up))
    return fb.astype(np.float32)                             # (n_freqs, n_mels)


def make_fourier_basis(n_fft, win_length):
    """Window-folded real/imag DFT bases, each (n_fft, n_fft//2+1)."""
    n = np.arange(win_length)
    window = 0.5 * (1.0 - np.cos(2.0 * np.pi * n / win_length))  # periodic Hann
    if win_length < n_fft:
        lpad = (n_fft - win_length) // 2
        window = np.pad(window, (lpad, n_fft - win_length - lpad))
    n_freq = n_fft // 2 + 1
    t = np.arange(n_fft)[:, None]
    k = np.arange(n_freq)[None, :]
    ang = 2.0 * np.pi * t * k / n_fft
    cos_b = (window[:, None] * np.cos(ang)).astype(np.float32)
    sin_b = (window[:, None] * np.sin(ang)).astype(np.float32)
    return cos_b, sin_b


def _ceil_to(x, m):
    return -(-x // m) * m


# ------------------------------- Pallas kernel ------------------------------

def _melspec_kernel(win_ref, basis_ref, fb_ref, out_ref, *, tf, hop, r, k_pad):
    """One (batch, frame-tile) grid step.

    win_ref:   (1, 1, tf+8, hop) f32 — hop-sized blocks of reflect-padded audio,
               row s of tile t holds padded_audio[(t*tf + s)*hop : +hop].
    basis_ref: (n_fft, 2*k_pad)      — Hann-folded [cos | sin] DFT basis.
    fb_ref:    (k_pad, m_pad)        — mel filterbank (Nyquist bin dropped).
    out_ref:   (1, m_pad, tf) f32    — log-mel, written transposed (lane-dense).
    """
    w = win_ref[0, 0]                                        # (tf+8, hop) f32
    # In-kernel framing (hop-block decomposition): frame f = concat of r
    # consecutive hop blocks, so  frames @ basis = sum_j shift_j(w) @ basis_j.
    acc = jnp.zeros((tf, 2 * k_pad), jnp.float32)
    for j in range(r):
        xj = w[j:j + tf, :].astype(basis_ref.dtype)          # bf16 MXU operand
        bj = basis_ref[j * hop:(j + 1) * hop, :]
        acc = acc + jnp.dot(xj, bj, preferred_element_type=jnp.float32)
    re = acc[:, :k_pad]
    im = acc[:, k_pad:]
    mag = jnp.sqrt(re * re + im * im)                        # f32, power=1
    mel = jnp.dot(mag.astype(fb_ref.dtype), fb_ref[...],
                  preferred_element_type=jnp.float32)        # (tf, m_pad)
    # log(clamp(., 1e-5)), write transposed -> frames stay on the lane axis.
    out_ref[0] = jnp.log(jnp.maximum(mel, 1e-5)).T           # (m_pad, tf)


# --------------------------------- wrapper ----------------------------------

class MelSpec:
    def __init__(self, filter_length=1024, hop_length=256, win_length=1024,
                 n_mel_channels=100, sampling_rate=24000,
                 compute_dtype=jnp.bfloat16):
        # TODO(synk): hop_length that does not divide n_fft would need the
        # wrapper-framing fallback; the module defaults (1024/256) satisfy this.
        assert filter_length % hop_length == 0, "in-kernel framing needs hop | n_fft"
        self.n_fft = filter_length
        self.hop = hop_length
        self.win = win_length
        self.n_mels = n_mel_channels
        self.sr = sampling_rate
        self.n_freq = filter_length // 2 + 1
        self.r = filter_length // hop_length
        self.compute_dtype = compute_dtype

        cos_b, sin_b = make_fourier_basis(self.n_fft, self.win)
        fb = melscale_fbanks(self.n_freq, 0.0, sampling_rate / 2.0,
                             n_mel_channels, sampling_rate)
        # full-precision copies (incl. Nyquist) for the pure-JAX reference
        self._cos_full, self._sin_full, self._fb_full = cos_b, sin_b, fb

        # Drop the Nyquist bin: with f_max == sr/2 its mel-filter row is 0, so
        # K = n_fft // 2 is exact and lane / MXU aligned.
        k = self.n_fft // 2
        self.k_pad = _ceil_to(k, 128)
        self.m_pad = _ceil_to(self.n_mels, 128)
        cos_p = np.pad(cos_b[:, :k], ((0, 0), (0, self.k_pad - k)))
        sin_p = np.pad(sin_b[:, :k], ((0, 0), (0, self.k_pad - k)))
        fb_p = np.pad(fb[:k, :], ((0, self.k_pad - k),
                                  (0, self.m_pad - self.n_mels)))
        # fuse cos|sin -> a single DFT-basis matrix (one weight stream)
        basis = np.concatenate([cos_p, sin_p], axis=1)       # (n_fft, 2*k_pad)
        self.basis = jnp.asarray(basis, dtype=compute_dtype)
        self.fb = jnp.asarray(fb_p, dtype=compute_dtype)

    def __call__(self, inp):
        if inp.ndim == 3:                                    # 'b 1 nw -> b nw'
            inp = inp[:, 0, :]
        assert inp.ndim == 2
        B, n_samples = inp.shape
        n_frames = 1 + n_samples // self.hop

        # Frame tile: prefer TF=512 (VMEM per step stays well under the 32 MiB
        # scoped limit even with double buffering); shrink for short clips, and
        # when B == 1 keep >= 2 grid points so both v7x TensorCores get work.
        tf = 512
        while tf > 128 and n_frames <= tf // 2:
            tf //= 2
        if B == 1:
            while tf > 128 and pl.cdiv(n_frames, tf) < 2:
                tf //= 2
        f_pad = _ceil_to(n_frames, tf)
        n_tiles = f_pad // tf

        # Build the hop-block windows (TF blocks per tile + an 8-block overlap
        # tail) with reshape/slice/concat only — no 4x frames blowup, no
        # separate pad/astype passes.  Frames stay f32; the kernel casts to the
        # compute dtype right before the MXU.
        pad = self.n_fft // 2
        x = jnp.pad(inp.astype(jnp.float32), ((0, 0), (pad, pad)),
                    mode="reflect")
        total = (n_tiles + 1) * tf * self.hop
        assert total >= x.shape[1]
        x = jnp.pad(x, ((0, 0), (0, total - x.shape[1])))
        blocks = x.reshape(B, (n_tiles + 1) * tf, self.hop)
        main = blocks[:, :n_tiles * tf].reshape(B, n_tiles, tf, self.hop)
        tail = blocks[:, tf:].reshape(B, n_tiles, tf, self.hop)[:, :, :8, :]
        windows = jnp.concatenate([main, tail], axis=2)      # (B,nt,tf+8,hop)

        kernel = functools.partial(_melspec_kernel, tf=tf, hop=self.hop,
                                   r=self.r, k_pad=self.k_pad)

        flops = (2 * B * f_pad * self.n_fft * 2 * self.k_pad
                 + 2 * B * f_pad * self.k_pad * self.m_pad)
        transcendentals = B * f_pad * (self.k_pad + self.m_pad)
        bytes_accessed = (windows.size * windows.dtype.itemsize
                          + self.basis.size * self.basis.dtype.itemsize
                          + self.fb.size * self.fb.dtype.itemsize
                          + B * self.m_pad * f_pad * 4)

        out = pl.pallas_call(
            kernel,
            out_shape=jax.ShapeDtypeStruct((B, self.m_pad, f_pad), jnp.float32),
            grid_spec=pltpu.PrefetchScalarGridSpec(
                num_scalar_prefetch=0,
                grid=(B, n_tiles),
                in_specs=[
                    # per-tile audio-block window: changes every grid step
                    pl.BlockSpec((1, 1, tf + 8, self.hop),
                                 lambda b, t: (b, t, 0, 0)),
                    # grid-invariant weights (constant index_map -> fetched once)
                    # TODO(synk): pipeline_mode=pl.Buffered(1) would single-buffer
                    # these; unnecessary at current VMEM usage (< ~16 MiB).
                    pl.BlockSpec((self.n_fft, 2 * self.k_pad),
                                 lambda b, t: (0, 0)),
                    pl.BlockSpec((self.k_pad, self.m_pad),
                                 lambda b, t: (0, 0)),
                ],
                out_specs=pl.BlockSpec((1, self.m_pad, tf),
                                       lambda b, t: (b, 0, t)),
            ),
            compiler_params=pltpu.CompilerParams(
                dimension_semantics=("parallel", "parallel"),
                vmem_limit_bytes=32 * 1024 * 1024,
            ),
            cost_estimate=pl.CostEstimate(
                flops=flops,
                transcendentals=transcendentals,
                bytes_accessed=bytes_accessed),
        )(windows, self.basis, self.fb)

        # output is already (B, n_mels_pad, frames_pad): just strip padding
        return out[:, :self.n_mels, :n_frames]


# ------------------------- pure-JAX reference (check) ------------------------

def _frame_signal(inp, n_fft, hop):
    """center=True reflect-padded framing -> (B, n_frames, n_fft) float32."""
    B, n_samples = inp.shape
    pad = n_fft // 2
    x = jnp.pad(inp.astype(jnp.float32), ((0, 0), (pad, pad)), mode="reflect")
    n_frames = 1 + n_samples // hop
    idx = np.arange(n_frames)[:, None] * hop + np.arange(n_fft)[None, :]
    return x[:, idx], n_frames


def melspec_ref(inp, m: MelSpec, weight_dtype=jnp.float32):
    """Reference using the FULL bases (incl. Nyquist), HIGHEST-precision dots."""
    if inp.ndim == 3:
        inp = inp[:, 0, :]
    frames, _ = _frame_signal(inp, m.n_fft, m.hop)
    basis = jnp.asarray(np.concatenate([m._cos_full, m._sin_full], axis=1),
                        dtype=weight_dtype)
    y = jnp.einsum("bfn,nk->bfk", frames.astype(weight_dtype), basis,
                   preferred_element_type=jnp.float32,
                   precision=jax.lax.Precision.HIGHEST)
    nf = m.n_freq
    re, im = y[..., :nf], y[..., nf:]
    mag = jnp.sqrt(re * re + im * im)
    fb = jnp.asarray(m._fb_full, dtype=weight_dtype)
    mel = jnp.einsum("bfk,km->bfm", mag.astype(weight_dtype), fb,
                     preferred_element_type=jnp.float32,
                     precision=jax.lax.Precision.HIGHEST)
    return jnp.transpose(jnp.log(jnp.maximum(mel, 1e-5)), (0, 2, 1))


# ----------------------------------- main ------------------------------------

if __name__ == "__main__":
    # Small, module-consistent configuration (constructor args scaled down;
    # hop | n_fft as for the real defaults 1024/256 -> r = 4).
    B, N_SAMPLES = 2, 1024
    key = jax.random.PRNGKey(0)
    audio = jax.random.normal(key, (B, 1, N_SAMPLES), dtype=jnp.float32)

    cfg = dict(filter_length=256, hop_length=64, win_length=256,
               n_mel_channels=32, sampling_rate=24000)
    n_frames = 1 + N_SAMPLES // cfg["hop_length"]

    # Default path: bf16 MXU operands, f32 accumulation & elementwise math.
    # Compared against a bf16-consistent JAX reference (isolates kernel
    # plumbing; the residual difference is only summation order / bf16 ULPs).
    mel_bf16 = MelSpec(**cfg)                                 # bf16 default
    out_bf16 = jax.block_until_ready(mel_bf16(audio))
    assert out_bf16.shape == (B, cfg["n_mel_channels"], n_frames)
    ref_bf16 = jax.block_until_ready(melspec_ref(audio, mel_bf16, jnp.bfloat16))
    np.testing.assert_allclose(np.asarray(out_bf16), np.asarray(ref_bf16),
                               rtol=2e-2, atol=2e-2)

    # Full-f32 weight path: tight check against the f32 reference — this is
    # the numerics check against the PyTorch module's semantics.
    mel_f32 = MelSpec(**cfg, compute_dtype=jnp.float32)
    out_f32 = jax.block_until_ready(mel_f32(audio))
    assert out_f32.shape == (B, cfg["n_mel_channels"], n_frames)
    ref_f32 = jax.block_until_ready(melspec_ref(audio, mel_f32, jnp.float32))
    np.testing.assert_allclose(np.asarray(out_f32), np.asarray(ref_f32),
                               rtol=1e-3, atol=1e-3)

    print("KERNEL_OK")
</pallas_src>

<mosaic_0001>
module attributes {stable_mosaic.version = 11 : i64} {
  func.func @_melspec_kernel(%arg0: i32, %arg1: i32, %arg2: memref<1x1x136x64xf32, #tpu.memory_space<vmem>>, %arg3: memref<256x256xbf16, #tpu.memory_space<vmem>>, %arg4: memref<128x128xbf16, #tpu.memory_space<vmem>>, %arg5: memref<1x128x128xf32, #tpu.memory_space<vmem>>) attributes {dimension_semantics = [#tpu.dimension_semantics<parallel>, #tpu.dimension_semantics<parallel>], iteration_bounds = array<i64: 2, 1>, scalar_prefetch = 0 : i64, scratch_operands = 0 : i64, tpu.core_type = #tpu.core_type<tc>, window_params = [{transform_indices = @transform_0, window_bounds = array<i64: 1, 1, 136, 64>}, {pipeline_mode = #tpu.pipeline_mode<synchronous>, transform_indices = @transform_1, window_bounds = array<i64: 256, 256>}, {pipeline_mode = #tpu.pipeline_mode<synchronous>, transform_indices = @transform_2, window_bounds = array<i64: 128, 128>}, {transform_indices = @transform_3, window_bounds = array<i64: 1, 128, 128>}]} {
    %c0 = arith.constant 0 : index
    %c0_0 = arith.constant 0 : index
    %c0_1 = arith.constant 0 : index
    %c0_2 = arith.constant 0 : index
    %0 = vector.load %arg2[%c0, %c0_0, %c0_1, %c0_2] : memref<1x1x136x64xf32, #tpu.memory_space<vmem>>, vector<1x1x136x64xf32>
    %1 = vector.shape_cast %0 : vector<1x1x136x64xf32> to vector<136x64xf32>
    %cst = arith.constant 0.000000e+00 : f32
    %2 = vector.broadcast %cst : f32 to vector<128x256xf32>
    %3 = vector.extract_strided_slice %1 {offsets = [0, 0], sizes = [128, 64], strides = [1, 1]} : vector<136x64xf32> to vector<128x64xf32>
    %4 = arith.truncf %3 : vector<128x64xf32> to vector<128x64xbf16>
    %c0_3 = arith.constant 0 : index
    %c0_4 = arith.constant 0 : index
    %5 = vector.load %arg3[%c0_3, %c0_4] : memref<256x256xbf16, #tpu.memory_space<vmem>>, vector<64x256xbf16>
    %cst_5 = arith.constant dense<0.000000e+00> : vector<128x256xf32>
    %6 = tpu.matmul %4, %5, %cst_5 {dimension_numbers = #tpu.dot_dimension_numbers<[1], [0], [0], [1], [0, 0, 1, 1], [], []>} : vector<128x64xbf16>, vector<64x256xbf16>, vector<128x256xf32> -> vector<128x256xf32>
    %7 = arith.addf %2, %6 : vector<128x256xf32>
    %8 = vector.extract_strided_slice %1 {offsets = [1, 0], sizes = [128, 64], strides = [1, 1]} : vector<136x64xf32> to vector<128x64xf32>
    %9 = arith.truncf %8 : vector<128x64xf32> to vector<128x64xbf16>
    %c64 = arith.constant 64 : index
    %c0_6 = arith.constant 0 : index
    %10 = vector.load %arg3[%c64, %c0_6] : memref<256x256xbf16, #tpu.memory_space<vmem>>, vector<64x256xbf16>
    %cst_7 = arith.constant dense<0.000000e+00> : vector<128x256xf32>
    %11 = tpu.matmul %9, %10, %cst_7 {dimension_numbers = #tpu.dot_dimension_numbers<[1], [0], [0], [1], [0, 0, 1, 1], [], []>} : vector<128x64xbf16>, vector<64x256xbf16>, vector<128x256xf32> -> vector<128x256xf32>
    %12 = arith.addf %7, %11 : vector<128x256xf32>
    %13 = vector.extract_strided_slice %1 {offsets = [2, 0], sizes = [128, 64], strides = [1, 1]} : vector<136x64xf32> to vector<128x64xf32>
    %14 = arith.truncf %13 : vector<128x64xf32> to vector<128x64xbf16>
    %c128 = arith.constant 128 : index
    %c0_8 = arith.constant 0 : index
    %15 = vector.load %arg3[%c128, %c0_8] : memref<256x256xbf16, #tpu.memory_space<vmem>>, vector<64x256xbf16>
    %cst_9 = arith.constant dense<0.000000e+00> : vector<128x256xf32>
    %16 = tpu.matmul %14, %15, %cst_9 {dimension_numbers = #tpu.dot_dimension_numbers<[1], [0], [0], [1], [0, 0, 1, 1], [], []>} : vector<128x64xbf16>, vector<64x256xbf16>, vector<128x256xf32> -> vector<128x256xf32>
    %17 = arith.addf %12, %16 : vector<128x256xf32>
    %18 = vector.extract_strided_slice %1 {offsets = [3, 0], sizes = [128, 64], strides = [1, 1]} : vector<136x64xf32> to vector<128x64xf32>
    %19 = arith.truncf %18 : vector<128x64xf32> to vector<128x64xbf16>
    %c192 = arith.constant 192 : index
    %c0_10 = arith.constant 0 : index
    %20 = vector.load %arg3[%c192, %c0_10] : memref<256x256xbf16, #tpu.memory_space<vmem>>, vector<64x256xbf16>
    %cst_11 = arith.constant dense<0.000000e+00> : vector<128x256xf32>
    %21 = tpu.matmul %19, %20, %cst_11 {dimension_numbers = #tpu.dot_dimension_numbers<[1], [0], [0], [1], [0, 0, 1, 1], [], []>} : vector<128x64xbf16>, vector<64x256xbf16>, vector<128x256xf32> -> vector<128x256xf32>
    %22 = arith.addf %17, %21 : vector<128x256xf32>
    %23 = vector.extract_strided_slice %22 {offsets = [0, 0], sizes = [128, 128], strides = [1, 1]} : vector<128x256xf32> to vector<128x128xf32>
    %24 = vector.extract_strided_slice %22 {offsets = [0, 128], sizes = [128, 128], strides = [1, 1]} : vector<128x256xf32> to vector<128x128xf32>
    %25 = arith.mulf %23, %23 : vector<128x128xf32>
    %26 = arith.mulf %24, %24 : vector<128x128xf32>
    %27 = arith.addf %25, %26 : vector<128x128xf32>
    %28 = math.sqrt %27 : vector<128x128xf32>
    %29 = arith.truncf %28 : vector<128x128xf32> to vector<128x128xbf16>
    %c0_12 = arith.constant 0 : index
    %c0_13 = arith.constant 0 : index
    %30 = vector.load %arg4[%c0_12, %c0_13] : memref<128x128xbf16, #tpu.memory_space<vmem>>, vector<128x128xbf16>
    %cst_14 = arith.constant dense<0.000000e+00> : vector<128x128xf32>
    %31 = tpu.matmul %29, %30, %cst_14 {dimension_numbers = #tpu.dot_dimension_numbers<[1], [0], [0], [1], [0, 0, 1, 1], [], []>} : vector<128x128xbf16>, vector<128x128xbf16>, vector<128x128xf32> -> vector<128x128xf32>
    %cst_15 = arith.constant 9.99999974E-6 : f32
    %32 = vector.broadcast %cst_15 : f32 to vector<128x128xf32>
    %33 = arith.maximumf %31, %32 : vector<128x128xf32>
    %34 = math.log %33 : vector<128x128xf32>
    %35 = tpu.transpose %34, [1, 0] : vector<128x128xf32> -> vector<128x128xf32>
    %c0_16 = arith.constant 0 : index
    %c0_17 = arith.constant 0 : index
    %c0_18 = arith.constant 0 : index
    %36 = vector.load %arg5[%c0_16, %c0_17, %c0_18] : memref<1x128x128xf32, #tpu.memory_space<vmem>>, vector<1x128x128xf32>
    %37 = vector.shape_cast %36 : vector<1x128x128xf32> to vector<128x128xf32>
    %38 = vector.shape_cast %35 : vector<128x128xf32> to vector<1x128x128xf32>
    tpu.vector_store %arg5[%c0_16, %c0_17, %c0_18], %38 {strides = array<i32>} : memref<1x128x128xf32, #tpu.memory_space<vmem>>, vector<1x128x128xf32>,
    return
  }
  func.func @transform_0(%arg0: i32, %arg1: i32) -> (i32, i32, i32, i32) {
    %c0_i32 = arith.constant 0 : i32
    %c0_i32_0 = arith.constant 0 : i32
    %c0_i32_1 = arith.constant 0 : i32
    return %arg0, %arg1, %c0_i32, %c0_i32_0 : i32, i32, i32, i32
  }
  func.func @transform_1(%arg0: i32, %arg1: i32) -> (i32, i32) {
    %c0_i32 = arith.constant 0 : i32
    %c0_i32_0 = arith.constant 0 : i32
    %c0_i32_1 = arith.constant 0 : i32
    return %c0_i32, %c0_i32_0 : i32, i32
  }
  func.func @transform_2(%arg0: i32, %arg1: i32) -> (i32, i32) {
    %c0_i32 = arith.constant 0 : i32
    %c0_i32_0 = arith.constant 0 : i32
    %c0_i32_1 = arith.constant 0 : i32
    return %c0_i32, %c0_i32_0 : i32, i32
  }
  func.func @transform_3(%arg0: i32, %arg1: i32) -> (i32, i32, i32) {
    %c0_i32 = arith.constant 0 : i32
    %c0_i32_0 = arith.constant 0 : i32
    return %arg0, %c0_i32, %arg1 : i32, i32, i32
  }
}

</mosaic_0001>

<llo_original>
// kernel: tpu_custom_call.1
$region0: #{tpu_custom_call.1}
  #allocation0 [shape = 'u32[]', space=smem, size = 0x4, offset = 0x4, fixed_abs, tag = 'smem constant byte address 0x4 - core index']
  #allocation1 [shape = 'u32[144,128]{1,0:T(1,128)}', space=vmem, size = 0x12000, scoped, tag = 'internal scratch']
  %s0 = inlined_call_operand.vmem [shape: f32[2,1,136,64], index: 0, kind: input, shape index: {}]
  %s1 = inlined_call_operand.vmem [shape: bf16[256,256], index: 1, kind: input, shape index: {}]
  %s2 = inlined_call_operand.vmem [shape: bf16[128,128], index: 2, kind: input, shape index: {}]
  %s3 = inlined_call_operand.hbm [shape: f32[2,128,128], index: 3, kind: output, shape index: {}]
  %s4 = sld [smem:[#allocation0]]
  $region45: #{tpu_custom_call.1} parent=0
    _
  %s6 = ssub.s32 1, %s4
  %s7 = scalar_select 0, %s6, %s4
  $region1: #{tpu_custom_call.1} parent=0
    #allocation2 [shape = 'u8[131072]{0}', space=vmem, size = 0x20000, scoped, tag = 'output window, operand 0']
    #allocation3 [shape = 's32[2]{0}', space=sflag, size = 0x8, scoped, tag = 'scoped memory for tpu_custom_call.1']
    %8 = vsyncpa [#allocation3], 0
    %s9 = scalar_lea.sflag [#allocation3], 1
    %10 = vsyncpa %s9, 0
    loop: start=0, step=1, limit=4
    $region2: #{tpu_custom_call.1} parent=1 // loop_pre_header
      _
    $region3: #{tpu_custom_call.1} parent=1 // loop_header
      %s12 = sphi 0, %s16
      %p13 = scmp.ge.s32.totalorder %s12, 4
      %s19 = sphi 0, %s31
      %s20 = sphi 0, %s27
      %s21 = sphi 0, %s19
      %s22 = sphi 0, %s20
      %s23 = sphi 0, %s21
      %s24 = sphi 0, %s22
      %s36 = sphi 0, %s38
      %s39 = sphi 0, %s36
      %s40 = sphi 0, %s39
      %s56 = sphi 0, %s40
      %s60 = sphi 0, %s60
      %s62 = sphi 0, %s60
      %s63 = sphi 0, %s62
      %s77 = sphi 0, %s63
      %s81 = sphi 0, %s81
      %s83 = sphi 0, %s81
      %s84 = sphi 0, %s83
      %s98 = sphi 0, %s84
      %s106 = sphi 0, %s108
      %s109 = sphi 0, %s106
      %s110 = sphi 0, %s109
      %s126 = sphi 0, %s110
    $region4: #{tpu_custom_call.1} parent=1 // loop_header_branch
      %15 = sbr.rel (%p13) target = $region8
    $region5: #{tpu_custom_call.1} parent=1 // loop_body
      %s17 = ssub.s32 %s12, 1
      %s18 = ssub.s32 %s12, 2
      %s25 = sadd.s32 1, %s20
      %p26 = scmp.ge.s32.totalorder %s25, 1
      %s27 = scalar_select %p26, 0, %s25
      %s28 = sadd.s32 1, %s19
      %s29 = scalar_select %p26, %s28, %s19
      %p30 = scmp.ge.s32.totalorder %s29, 2
      %s31 = scalar_select %p30, 0, %s29
      %s32 = ssub.s32 %s19, %s31
      %s33 = ssub.s32 %s20, %s27
      %s34 = sor.u32 %s32, %s33
      %p35 = scmp.eq.s32.totalorder %s34, 0
      %s37 = sadd.s32 %s36, 1
      %s38 = scalar_select %p35, %s36, %s37
      %p41 = pneg %p35
      %p42 = scmp.eq.s32.totalorder %s12, 1
      %p43 = por %p41, %p42
      %p44 = scmp.ne.s32.totalorder %s36, %s39
      %p45 = scmp.eq.s32.totalorder %s12, 0
      %p46 = por %p44, %p45
      %p47 = scmp.ne.s32.totalorder %s36, %s39
      %p48 = scmp.eq.s32.totalorder %s17, 1
      %p49 = por %p47, %p48
      %p50 = scmp.ne.s32.totalorder %s39, %s40
      %p51 = scmp.eq.s32.totalorder %s17, 0
      %p52 = por %p50, %p51
      %p53 = scmp.ne.s32.totalorder %s39, %s40
      %p54 = scmp.eq.s32.totalorder %s18, 1
      %p55 = por %p53, %p54
      %p57 = scmp.ne.s32.totalorder %s40, %s56
      %p58 = scmp.eq.s32.totalorder %s18, 0
      %p59 = por %p57, %p58
      %s61 = sadd.s32 %s60, 1
      %p64 = scmp.eq.s32.totalorder %s12, 1
      %p65 = scmp.ne.s32.totalorder %s60, %s62
      %p66 = scmp.eq.s32.totalorder %s12, 0
      %p67 = por %p65, %p66
      %p68 = scmp.ne.s32.totalorder %s60, %s62
      %p69 = scmp.eq.s32.totalorder %s17, 1
      %p70 = por %p68, %p69
      %p71 = scmp.ne.s32.totalorder %s62, %s63
      %p72 = scmp.eq.s32.totalorder %s17, 0
      %p73 = por %p71, %p72
      %p74 = scmp.ne.s32.totalorder %s62, %s63
      %p75 = scmp.eq.s32.totalorder %s18, 1
      %p76 = por %p74, %p75
      %p78 = scmp.ne.s32.totalorder %s63, %s77
      %p79 = scmp.eq.s32.totalorder %s18, 0
      %p80 = por %p78, %p79
      %s82 = sadd.s32 %s81, 1
      %p85 = scmp.eq.s32.totalorder %s12, 1
      %p86 = scmp.ne.s32.totalorder %s81, %s83
      %p87 = scmp.eq.s32.totalorder %s12, 0
      %p88 = por %p86, %p87
      %p89 = scmp.ne.s32.totalorder %s81, %s83
      %p90 = scmp.eq.s32.totalorder %s17, 1
      %p91 = por %p89, %p90
      %p92 = scmp.ne.s32.totalorder %s83, %s84
      %p93 = scmp.eq.s32.totalorder %s17, 0
      %p94 = por %p92, %p93
      %p95 = scmp.ne.s32.totalorder %s83, %s84
      %p96 = scmp.eq.s32.totalorder %s18, 1
      %p97 = por %p95, %p96
      %p99 = scmp.ne.s32.totalorder %s84, %s98
      %p100 = scmp.eq.s32.totalorder %s18, 0
      %p101 = por %p99, %p100
      %s102 = ssub.s32 %s19, %s31
      %s103 = ssub.s32 %s20, %s27
      %s104 = sor.u32 %s102, %s103
      %p105 = scmp.eq.s32.totalorder %s104, 0
      %s107 = sadd.s32 %s106, 1
      %s108 = scalar_select %p105, %s106, %s107
      %p111 = pneg %p105
      %p112 = scmp.eq.s32.totalorder %s12, 1
      %p113 = por %p111, %p112
      %p114 = scmp.ne.s32.totalorder %s106, %s109
      %p115 = scmp.eq.s32.totalorder %s12, 0
      %p116 = por %p114, %p115
      %p117 = scmp.ne.s32.totalorder %s106, %s109
      %p118 = scmp.eq.s32.totalorder %s17, 1
      %p119 = por %p117, %p118
      %p120 = scmp.ne.s32.totalorder %s109, %s110
      %p121 = scmp.eq.s32.totalorder %s17, 0
      %p122 = por %p120, %p121
      %p123 = scmp.ne.s32.totalorder %s109, %s110
      %p124 = scmp.eq.s32.totalorder %s18, 1
      %p125 = por %p123, %p124
      %p127 = scmp.ne.s32.totalorder %s110, %s126
      %p128 = scmp.eq.s32.totalorder %s18, 0
      %p129 = por %p127, %p128
      %p130 = scmp.le.s32.totalorder 1, %s12
      %p131 = scmp.lt.s32.totalorder %s12, 3
      %p132 = pnand %p130, %p131
      %p133 = pneg %p132
      // Predicated region
      $region9: #{tpu_custom_call.1} parent=5 // pred_check
        _
      $region10: #{tpu_custom_call.1} parent=5 // pred_check_branch
        %135 = sbr.rel (%p132) target = $region12
      $region11: #{tpu_custom_call.1} parent=5 // pred_region
        %s136 = ssub.s32 %s12, 1
        // Predicated region
        $region13: #{tpu_custom_call.1} parent=11 // pred_check
          %p137 = pneg %p73
        $region14: #{tpu_custom_call.1} parent=11 // pred_check_branch
          %139 = sbr.rel (%p137) target = $region16
        $region15: #{tpu_custom_call.1} parent=11 // pred_region
          _
        $region16: #{tpu_custom_call.1} parent=11 // pred_fallthru
          _
        // Predicated region
        $region17: #{tpu_custom_call.1} parent=11 // pred_check
          %p140 = pneg %p94
        $region18: #{tpu_custom_call.1} parent=11 // pred_check_branch
          %142 = sbr.rel (%p140) target = $region20
        $region19: #{tpu_custom_call.1} parent=11 // pred_region
          _
        $region20: #{tpu_custom_call.1} parent=11 // pred_fallthru
          _
      $region12: #{tpu_custom_call.1} parent=5 // pred_fallthru
        _
      %p143 = scmp.lt.s32.totalorder %s12, 2
      // Predicated region
      $region21: #{tpu_custom_call.1} parent=5 // pred_check
        %p144 = pneg %p143
      $region22: #{tpu_custom_call.1} parent=5 // pred_check_branch
        %146 = sbr.rel (%p144) target = $region24
      $region23: #{tpu_custom_call.1} parent=5 // pred_region
        // Predicated region
        $region25: #{tpu_custom_call.1} parent=23 // pred_check
          %p147 = pneg %p46
        $region26: #{tpu_custom_call.1} parent=23 // pred_check_branch
          %149 = sbr.rel (%p147) target = $region28
        $region27: #{tpu_custom_call.1} parent=23 // pred_region
          %p150 = scmp.lt.s32.totalorder %s19, 1
          %s151 = scalar_select %p150, %s19, 1
          %p152 = scmp.lt.s32.totalorder %s20, 0
          %s153 = scalar_select %p152, %s20, 0
          %s154 = smul.addr %s153, 17
          %s155 = smul.addr %s151, 17
          %s156 = sadd.s32 %s154, %s155
          %s157 = smul.addr %s156, 8
          %s158 = scalar_lea.vmem %s0, %s157
        $region28: #{tpu_custom_call.1} parent=23 // pred_fallthru
          _
      $region24: #{tpu_custom_call.1} parent=5 // pred_fallthru
        _
      %p159 = scmp.le.s32.totalorder 1, %s12
      %p160 = scmp.lt.s32.totalorder %s12, 3
      %p161 = pnand %p159, %p160
      %p162 = pneg %p161
      // Predicated region
      $region29: #{tpu_custom_call.1} parent=5 // pred_check
        _
      $region30: #{tpu_custom_call.1} parent=5 // pred_check_branch
        %164 = sbr.rel (%p161) target = $region32
      $region31: #{tpu_custom_call.1} parent=5 // pred_region
        %s165 = ssub.s32 %s12, 1
        %p166 = scmp.lt.s32.totalorder %s21, 1
        %s167 = scalar_select %p166, %s21, 1
        %p168 = scmp.lt.s32.totalorder %s22, 0
        %s169 = scalar_select %p168, %s22, 0
        %s170 = smul.addr %s169, 17
        %s171 = smul.addr %s167, 17
        %s172 = sadd.s32 %s170, %s171
        %s173 = smul.addr %s172, 8
        %s174 = scalar_lea.vmem %s0, %s173
        %p175 = pneg %p52
        %p176 = pneg %p49
        %p177 = pneg %p73
        %p178 = pneg %p70
        %p179 = pneg %p94
        %p180 = pneg %p91
        %p181 = pneg %p122
        %p182 = pneg %p119
        %s183 = sand.u32 %s109, 1
        %s184 = scalar_lea.sflag [#allocation3], %s183
        %s185 = sand.u32 %s109, 1
        %s186 = smul.addr %s185, 128
        %s187 = scalar_lea.vmem [#allocation2], %s186
        %p188 = scmp.lt.s32.totalorder %s21, 1
        %s189 = scalar_select %p188, %s21, 1
        %p190 = scmp.lt.s32.totalorder %s22, 0
        %s191 = scalar_select %p190, %s22, 0
        %s192 = smul.addr %s191, 17
        %s193 = smul.addr %s189, 17
        %s194 = sadd.s32 %s192, %s193
        %s195 = smul.addr %s194, 8
        %s196 = scalar_lea.vmem %s0, %s195
        %v198 = vld [vmem:[%s196] sm:$0xff]
        %v199 = vld [vmem:[%s196 + $0x8] sm:$0xff]
        %v200 = vld [vmem:[%s196 + $0x10] sm:$0xff]
        %v201 = vld [vmem:[%s196 + $0x18] sm:$0xff]
        %v202 = vld [vmem:[%s196 + $0x20] sm:$0xff]
        %v203 = vld [vmem:[%s196 + $0x28] sm:$0xff]
        %v204 = vld [vmem:[%s196 + $0x30] sm:$0xff]
        %v205 = vld [vmem:[%s196 + $0x38] sm:$0xff]
        %v206 = vld [vmem:[%s196 + $0x40] sm:$0xff]
        %v207 = vld [vmem:[%s196 + $0x48] sm:$0xff]
        %v208 = vld [vmem:[%s196 + $0x50] sm:$0xff]
        %v209 = vld [vmem:[%s196 + $0x58] sm:$0xff]
        %v210 = vld [vmem:[%s196 + $0x60] sm:$0xff]
        %v211 = vld [vmem:[%s196 + $0x68] sm:$0xff]
        %v212 = vld [vmem:[%s196 + $0x70] sm:$0xff]
        %v213 = vld [vmem:[%s196 + $0x78] sm:$0xff]
        %v214 = vld [vmem:[%s196 + $0x80] sm:$0xff]
        %v215 = vpack.c.bf16 %v199, %v198
        %v216 = vpack.c.bf16 %v201, %v200
        %v217 = vpack.c.bf16 %v203, %v202
        %v218 = vpack.c.bf16 %v205, %v204
        %v219 = vpack.c.bf16 %v207, %v206
        %v220 = vpack.c.bf16 %v209, %v208
        %v221 = vpack.c.bf16 %v211, %v210
        %v222 = vpack.c.bf16 %v213, %v212
        %v223 = vld [vmem:[%s1] sm:$0xff]
        %v224 = vld [vmem:[%s1 + $0x8] sm:$0xff]
        %v225 = vld [vmem:[%s1 + $0x10] sm:$0xff]
        %v226 = vld [vmem:[%s1 + $0x18] sm:$0xff]
        %v227 = vld [vmem:[%s1 + $0x20] sm:$0xff]
        %v228 = vld [vmem:[%s1 + $0x28] sm:$0xff]
        %v229 = vld [vmem:[%s1 + $0x30] sm:$0xff]
        %v230 = vld [vmem:[%s1 + $0x38] sm:$0xff]
        %v231 = vpack.c.bf16 %v214, %v214
        %v232 = vld [vmem:[%s1 + $0x40] sm:$0xff]
        %v233 = vld [vmem:[%s1 + $0x48] sm:$0xff]
        %v234 = vld [vmem:[%s1 + $0x50] sm:$0xff]
        %v235 = vld [vmem:[%s1 + $0x58] sm:$0xff]
        %v236 = vld [vmem:[%s1 + $0x60] sm:$0xff]
        %v237 = vld [vmem:[%s1 + $0x68] sm:$0xff]
        %v238 = vld [vmem:[%s1 + $0x70] sm:$0xff]
        %v239 = vld [vmem:[%s1 + $0x78] sm:$0xff]
        %vm240 = vsmask.f32 7424
        %v242 = vshrl.u32 %v215, 16
        %v244 = vshll.u32 %v215, 16
        %v246 = vrot.slane %v244, 1
        %v247 = vor.u32 %v242, %v246
        %v249 = vshll.u32 %v216, 16
        %v251 = vrot.slane %v249, 1
        %v252 = vsel %vm240, %v247, %v251
        %v253 = vshrl.u32 %v216, 16
        %v255 = vor.u32 %v253, %v251
        %v257 = vshll.u32 %v217, 16
        %v259 = vrot.slane %v257, 1
        %v260 = vsel %vm240, %v255, %v259
        %v261 = vshrl.u32 %v217, 16
        %v263 = vor.u32 %v261, %v259
        %v265 = vshll.u32 %v218, 16
        %v267 = vrot.slane %v265, 1
        %v268 = vsel %vm240, %v263, %v267
        %v269 = vshrl.u32 %v218, 16
        %v271 = vor.u32 %v269, %v267
        %v273 = vshll.u32 %v219, 16
        %v275 = vrot.slane %v273, 1
        %v276 = vsel %vm240, %v271, %v275
        %v277 = vshrl.u32 %v219, 16
        %v279 = vor.u32 %v277, %v275
        %v281 = vshll.u32 %v220, 16
        %v283 = vrot.slane %v281, 1
        %v284 = vsel %vm240, %v279, %v283
        %v285 = vshrl.u32 %v220, 16
        %v287 = vor.u32 %v285, %v283
        %v289 = vshll.u32 %v221, 16
        %v291 = vrot.slane %v289, 1
        %v292 = vsel %vm240, %v287, %v291
        %v293 = vshrl.u32 %v221, 16
        %v295 = vor.u32 %v293, %v291
        %v297 = vshll.u32 %v222, 16
        %v299 = vrot.slane %v297, 1
        %v300 = vsel %vm240, %v295, %v299
        %v301 = vshrl.u32 %v222, 16
        %v303 = vor.u32 %v301, %v299
        %v305 = vshll.u32 %v231, 16
        %v307 = vrot.slane %v305, 1
        %v308 = vsel %vm240, %v303, %v307
        %v317 = vunpack.c.l.b16 %v232
        %v318 = vunpack.c.h.b16 %v232
        %v319 = vunpack.c.l.b16 %v233
        %v320 = vunpack.c.h.b16 %v233
        %v321 = vunpack.c.l.b16 %v234
        %v322 = vunpack.c.h.b16 %v234
        %v323 = vunpack.c.l.b16 %v235
        %v324 = vunpack.c.h.b16 %v235
        %v325 = vunpack.c.l.b16 %v236
        %v326 = vunpack.c.h.b16 %v236
        %v327 = vunpack.c.l.b16 %v237
        %v328 = vunpack.c.h.b16 %v237
        %v329 = vunpack.c.l.b16 %v238
        %v330 = vunpack.c.h.b16 %v238
        %v331 = vunpack.c.l.b16 %v239
        %v332 = vunpack.c.h.b16 %v239
        %v333 = vpack.c.b16 %v319, %v317
        %v334 = vpack.c.b16 %v320, %v318
        %v335 = vpack.c.b16 %v323, %v321
        %v336 = vpack.c.b16 %v324, %v322
        %v337 = vpack.c.b16 %v327, %v325
        %v338 = vpack.c.b16 %v328, %v326
        %v339 = vpack.c.b16 %v331, %v329
        %v340 = vpack.c.b16 %v332, %v330
        %vm349 = vcmask 523264
        %v351 = vsel %vm349, %v252, 0
        %v354 = vsel %vm349, %v260, 0
        %v357 = vsel %vm349, %v268, 0
        %v360 = vsel %vm349, %v276, 0
        %v363 = vsel %vm349, %v284, 0
        %v366 = vsel %vm349, %v292, 0
        %v369 = vsel %vm349, %v300, 0
        %v372 = vsel %vm349, %v308, 0
        %374 = vmatprep.subr.bf16.mxu0 %v334
        %375 = vmatpush1.bf16.msra.mxu0 %v333
        %376 = vmatprep.subr.bf16.mxu0 %v336
        %377 = vmatpush1.bf16.msra.mxu0 %v335
        %378 = vmatprep.subr.bf16.mxu0 %v338
        %379 = vmatpush1.bf16.msra.mxu0 %v337
        %380 = vmatprep.subr.bf16.mxu0 %v340
        %381 = vmatpush1.bf16.msra.mxu0 %v339
        %382 = vmatprep.subr.bf16.mxu0 0
        %383 = vmatpush1.bf16.msra.mxu0 0
        %384 = vmatprep.subr.bf16.mxu0 0
        %385 = vmatpush1.bf16.msra.mxu0 0
        %386 = vmatprep.subr.bf16.mxu0 0
        %387 = vmatpush1.bf16.msra.mxu0 0
        %388 = vmatprep.subr.bf16.mxu0 0
        %389 = vmatpush1.bf16.msra.mxu0 0
        %390 = vmatprep.subr.bf16.mxu0 0
        %391 = vmatpush1.bf16.msra.mxu0 0
        %392 = vmatprep.subr.bf16.mxu0 0
        %393 = vmatpush1.bf16.msra.mxu0 0
        %394 = vmatprep.subr.bf16.mxu0 0
        %395 = vmatpush1.bf16.msra.mxu0 0
        %396 = vmatprep.subr.bf16.mxu0 0
        %397 = vmatpush1.bf16.msra.mxu0 0
        %398 = vmatprep.subr.bf16.mxu0 0
        %399 = vmatpush1.bf16.msra.mxu0 0
        %400 = vmatprep.subr.bf16.mxu0 0
        %401 = vmatpush1.bf16.msra.mxu0 0
        %402 = vmatprep.subr.bf16.mxu0 0
        %403 = vmatpush1.bf16.msra.mxu0 0
        %404 = vmatprep.subr.bf16.mxu0 0
        %405 = vmatpush1.bf16.msra.mxu0 0
        %406 = vmatprep.mubr.bf16.mxu0 0
        %407 = vmatmul.mubr.bf16.gmra.mrb[0].mxu0 %v351
        %v408 = vpop.f32.mrb[0].mxu0
        %v409 = vadd.f32 0.0, %v408
        %v410 = vpop.f32.mrb[0].mxu0
        %v411 = vadd.f32 0.0, %v410
        %v412 = vpop.f32.mrb[0].mxu0
        %v413 = vadd.f32 0.0, %v412
        %v414 = vpop.f32.mrb[0].mxu0
        %v415 = vadd.f32 0.0, %v414
        %416 = vmatprep.mubr.bf16.mxu0 0
        %417 = vmatmul.mubr.bf16.gmra.mrb[0].mxu0 %v354
        %v418 = vpop.f32.mrb[0].mxu0
        %v419 = vadd.f32 0.0, %v418
        %v420 = vpop.f32.mrb[0].mxu0
        %v421 = vadd.f32 0.0, %v420
        %v422 = vpop.f32.mrb[0].mxu0
        %v423 = vadd.f32 0.0, %v422
        %v424 = vpop.f32.mrb[0].mxu0
        %v425 = vadd.f32 0.0, %v424
        %426 = vmatprep.mubr.bf16.mxu0 0
        %427 = vmatmul.mubr.bf16.gmra.mrb[0].mxu0 %v357
        %v428 = vpop.f32.mrb[0].mxu0
        %v429 = vadd.f32 0.0, %v428
        %v430 = vpop.f32.mrb[0].mxu0
        %v431 = vadd.f32 0.0, %v430
        %v432 = vpop.f32.mrb[0].mxu0
        %v433 = vadd.f32 0.0, %v432
        %v434 = vpop.f32.mrb[0].mxu0
        %v435 = vadd.f32 0.0, %v434
        %436 = vmatprep.mubr.bf16.mxu0 0
        %437 = vmatmul.mubr.bf16.gmra.mrb[0].mxu0 %v360
        %v438 = vpop.f32.mrb[0].mxu0
        %v439 = vadd.f32 0.0, %v438
        %v440 = vpop.f32.mrb[0].mxu0
        %v441 = vadd.f32 0.0, %v440
        %v442 = vpop.f32.mrb[0].mxu0
        %v443 = vadd.f32 0.0, %v442
        %v444 = vpop.f32.mrb[0].mxu0
        %v445 = vadd.f32 0.0, %v444
        %446 = vmatprep.mubr.bf16.mxu0 0
        %447 = vmatmul.mubr.bf16.gmra.mrb[0].mxu0 %v363
        %v448 = vpop.f32.mrb[0].mxu0
        %v449 = vadd.f32 0.0, %v448
        %v450 = vpop.f32.mrb[0].mxu0
        %v451 = vadd.f32 0.0, %v450
        %v452 = vpop.f32.mrb[0].mxu0
        %v453 = vadd.f32 0.0, %v452
        %v454 = vpop.f32.mrb[0].mxu0
        %v455 = vadd.f32 0.0, %v454
        %456 = vmatprep.mubr.bf16.mxu0 0
        %457 = vmatmul.mubr.bf16.gmra.mrb[0].mxu0 %v366
        %v458 = vpop.f32.mrb[0].mxu0
        %v459 = vadd.f32 0.0, %v458
        %v460 = vpop.f32.mrb[0].mxu0
        %v461 = vadd.f32 0.0, %v460
        %v462 = vpop.f32.mrb[0].mxu0
        %v463 = vadd.f32 0.0, %v462
        %v464 = vpop.f32.mrb[0].mxu0
        %v465 = vadd.f32 0.0, %v464
        %466 = vmatprep.mubr.bf16.mxu0 0
        %467 = vmatmul.mubr.bf16.gmra.mrb[0].mxu0 %v369
        %v468 = vpop.f32.mrb[0].mxu0
        %v469 = vadd.f32 0.0, %v468
        %v470 = vpop.f32.mrb[0].mxu0
        %v471 = vadd.f32 0.0, %v470
        %v472 = vpop.f32.mrb[0].mxu0
        %v473 = vadd.f32 0.0, %v472
        %v474 = vpop.f32.mrb[0].mxu0
        %v475 = vadd.f32 0.0, %v474
        %476 = vmatprep.mubr.bf16.mxu0 0
        %477 = vmatmul.mubr.bf16.gmra.mrb[0].mxu0 %v372
        %v478 = vpop.f32.mrb[0].mxu0
        %v479 = vadd.f32 0.0, %v478
        %v480 = vpop.f32.mrb[0].mxu0
        %v481 = vadd.f32 0.0, %v480
        %v482 = vpop.f32.mrb[0].mxu0
        %v483 = vadd.f32 0.0, %v482
        %v484 = vpop.f32.mrb[0].mxu0
        %v485 = vadd.f32 0.0, %v484
        %486 = vdwg.mxu0
        %v495 = vunpack.c.l.b16 %v223
        %v496 = vunpack.c.h.b16 %v223
        %v497 = vunpack.c.l.b16 %v224
        %v498 = vunpack.c.h.b16 %v224
        %v499 = vunpack.c.l.b16 %v225
        %v500 = vunpack.c.h.b16 %v225
        %v501 = vunpack.c.l.b16 %v226
        %v502 = vunpack.c.h.b16 %v226
        %v503 = vunpack.c.l.b16 %v227
        %v504 = vunpack.c.h.b16 %v227
        %v505 = vunpack.c.l.b16 %v228
        %v506 = vunpack.c.h.b16 %v228
        %v507 = vunpack.c.l.b16 %v229
        %v508 = vunpack.c.h.b16 %v229
        %v509 = vunpack.c.l.b16 %v230
        %v510 = vunpack.c.h.b16 %v230
        %v511 = vpack.c.b16 %v497, %v495
        %v512 = vpack.c.b16 %v498, %v496
        %v513 = vpack.c.b16 %v501, %v499
        %v514 = vpack.c.b16 %v502, %v500
        %v515 = vpack.c.b16 %v505, %v503
        %v516 = vpack.c.b16 %v506, %v504
        %v517 = vpack.c.b16 %v509, %v507
        %v518 = vpack.c.b16 %v510, %v508
        %v527 = vsel %vm349, %v215, 0
        %v529 = vsel %vm349, %v216, 0
        %v531 = vsel %vm349, %v217, 0
        %v533 = vsel %vm349, %v218, 0
        %v535 = vsel %vm349, %v219, 0
        %v537 = vsel %vm349, %v220, 0
        %v539 = vsel %vm349, %v221, 0
        %v541 = vsel %vm349, %v222, 0
        %543 = vmatprep.subr.bf16.mxu0 %v512
        %544 = vmatpush1.bf16.msra.mxu0 %v511
        %545 = vmatprep.subr.bf16.mxu0 %v514
        %546 = vmatpush1.bf16.msra.mxu0 %v513
        %547 = vmatprep.subr.bf16.mxu0 %v516
        %548 = vmatpush1.bf16.msra.mxu0 %v515
        %549 = vmatprep.subr.bf16.mxu0 %v518
        %550 = vmatpush1.bf16.msra.mxu0 %v517
        %551 = vmatprep.subr.bf16.mxu0 0
        %552 = vmatpush1.bf16.msra.mxu0 0
        %553 = vmatprep.subr.bf16.mxu0 0
        %554 = vmatpush1.bf16.msra.mxu0 0
        %555 = vmatprep.subr.bf16.mxu0 0
        %556 = vmatpush1.bf16.msra.mxu0 0
        %557 = vmatprep.subr.bf16.mxu0 0
        %558 = vmatpush1.bf16.msra.mxu0 0
        %559 = vmatprep.subr.bf16.mxu0 0
        %560 = vmatpush1.bf16.msra.mxu0 0
        %561 = vmatprep.subr.bf16.mxu0 0
        %562 = vmatpush1.bf16.msra.mxu0 0
        %563 = vmatprep.subr.bf16.mxu0 0
        %564 = vmatpush1.bf16.msra.mxu0 0
        %565 = vmatprep.subr.bf16.mxu0 0
        %566 = vmatpush1.bf16.msra.mxu0 0
        %567 = vmatprep.subr.bf16.mxu0 0
        %568 = vmatpush1.bf16.msra.mxu0 0
        %569 = vmatprep.subr.bf16.mxu0 0
        %570 = vmatpush1.bf16.msra.mxu0 0
        %571 = vmatprep.subr.bf16.mxu0 0
        %572 = vmatpush1.bf16.msra.mxu0 0
        %573 = vmatprep.subr.bf16.mxu0 0
        %574 = vmatpush1.bf16.msra.mxu0 0
        %575 = vmatprep.mubr.bf16.mxu0 0
        %576 = vmatmul.mubr.bf16.gmra.mrb[0].mxu0 %v527
        %v577 = vpop.f32.mrb[0].mxu0
        %v578 = vadd.f32 %v409, %v577
        %v579 = vpop.f32.mrb[0].mxu0
        %v580 = vadd.f32 %v411, %v579
        %v581 = vpop.f32.mrb[0].mxu0
        %v582 = vadd.f32 %v413, %v581
        %v583 = vpop.f32.mrb[0].mxu0
        %v584 = vadd.f32 %v415, %v583
        %585 = vmatprep.mubr.bf16.mxu0 0
        %586 = vmatmul.mubr.bf16.gmra.mrb[0].mxu0 %v529
        %v587 = vpop.f32.mrb[0].mxu0
        %v588 = vadd.f32 %v419, %v587
        %v589 = vpop.f32.mrb[0].mxu0
        %v590 = vadd.f32 %v421, %v589
        %v591 = vpop.f32.mrb[0].mxu0
        %v592 = vadd.f32 %v423, %v591
        %v593 = vpop.f32.mrb[0].mxu0
        %v594 = vadd.f32 %v425, %v593
        %595 = vmatprep.mubr.bf16.mxu0 0
        %596 = vmatmul.mubr.bf16.gmra.mrb[0].mxu0 %v531
        %v597 = vpop.f32.mrb[0].mxu0
        %v598 = vadd.f32 %v429, %v597
        %v599 = vpop.f32.mrb[0].mxu0
        %v600 = vadd.f32 %v431, %v599
        %v601 = vpop.f32.mrb[0].mxu0
        %v602 = vadd.f32 %v433, %v601
        %v603 = vpop.f32.mrb[0].mxu0
        %v604 = vadd.f32 %v435, %v603
        %605 = vmatprep.mubr.bf16.mxu0 0
        %606 = vmatmul.mubr.bf16.gmra.mrb[0].mxu0 %v533
        %v607 = vpop.f32.mrb[0].mxu0
        %v608 = vadd.f32 %v439, %v607
        %v609 = vpop.f32.mrb[0].mxu0
        %v610 = vadd.f32 %v441, %v609
        %v611 = vpop.f32.mrb[0].mxu0
        %v612 = vadd.f32 %v443, %v611
        %v613 = vpop.f32.mrb[0].mxu0
        %v614 = vadd.f32 %v445, %v613
        %615 = vmatprep.mubr.bf16.mxu0 0
        %616 = vmatmul.mubr.bf16.gmra.mrb[0].mxu0 %v535
        %v617 = vpop.f32.mrb[0].mxu0
        %v618 = vadd.f32 %v449, %v617
        %v619 = vpop.f32.mrb[0].mxu0
        %v620 = vadd.f32 %v451, %v619
        %v621 = vpop.f32.mrb[0].mxu0
        %v622 = vadd.f32 %v453, %v621
        %v623 = vpop.f32.mrb[0].mxu0
        %v624 = vadd.f32 %v455, %v623
        %625 = vmatprep.mubr.bf16.mxu0 0
        %626 = vmatmul.mubr.bf16.gmra.mrb[0].mxu0 %v537
        %v627 = vpop.f32.mrb[0].mxu0
        %v628 = vadd.f32 %v459, %v627
        %v629 = vpop.f32.mrb[0].mxu0
        %v630 = vadd.f32 %v461, %v629
        %v631 = vpop.f32.mrb[0].mxu0
        %v632 = vadd.f32 %v463, %v631
        %v633 = vpop.f32.mrb[0].mxu0
        %v634 = vadd.f32 %v465, %v633
        %635 = vmatprep.mubr.bf16.mxu0 0
        %636 = vmatmul.mubr.bf16.gmra.mrb[0].mxu0 %v539
        %v637 = vpop.f32.mrb[0].mxu0
        %v638 = vadd.f32 %v469, %v637
        %v639 = vpop.f32.mrb[0].mxu0
        %v640 = vadd.f32 %v471, %v639
        %v641 = vpop.f32.mrb[0].mxu0
        %v642 = vadd.f32 %v473, %v641
        %v643 = vpop.f32.mrb[0].mxu0
        %v644 = vadd.f32 %v475, %v643
        %645 = vmatprep.mubr.bf16.mxu0 0
        %646 = vmatmul.mubr.bf16.gmra.mrb[0].mxu0 %v541
        %v647 = vpop.f32.mrb[0].mxu0
        %v648 = vadd.f32 %v479, %v647
        %v649 = vpop.f32.mrb[0].mxu0
        %v650 = vadd.f32 %v481, %v649
        %v651 = vpop.f32.mrb[0].mxu0
        %v652 = vadd.f32 %v483, %v651
        %v653 = vpop.f32.mrb[0].mxu0
        %v654 = vadd.f32 %v485, %v653
        %655 = vdwg.mxu0
        %v656 = vld [vmem:[%s1 + $0x80] sm:$0xff]
        %v657 = vld [vmem:[%s1 + $0x88] sm:$0xff]
        %v658 = vld [vmem:[%s1 + $0x90] sm:$0xff]
        %v659 = vld [vmem:[%s1 + $0x98] sm:$0xff]
        %v660 = vld [vmem:[%s1 + $0xa0] sm:$0xff]
        %v661 = vld [vmem:[%s1 + $0xa8] sm:$0xff]
        %v662 = vld [vmem:[%s1 + $0xb0] sm:$0xff]
        %v663 = vld [vmem:[%s1 + $0xb8] sm:$0xff]
        %vm673 = vcmask 1046528
        %v674 = vrot.slane %v215, 1
        %v675 = vrot.slane %v216, 1
        %v676 = vsel %vm673, %v674, %v675
        %v677 = vrot.slane %v217, 1
        %v678 = vsel %vm673, %v675, %v677
        %v679 = vrot.slane %v218, 1
        %v680 = vsel %vm673, %v677, %v679
        %v681 = vrot.slane %v219, 1
        %v682 = vsel %vm673, %v679, %v681
        %v683 = vrot.slane %v220, 1
        %v684 = vsel %vm673, %v681, %v683
        %v685 = vrot.slane %v221, 1
        %v686 = vsel %vm673, %v683, %v685
        %v687 = vrot.slane %v222, 1
        %v688 = vsel %vm673, %v685, %v687
        %v689 = vrot.slane %v231, 1
        %v690 = vsel %vm673, %v687, %v689
        %v699 = vunpack.c.l.b16 %v656
        %v700 = vunpack.c.h.b16 %v656
        %v701 = vunpack.c.l.b16 %v657
        %v702 = vunpack.c.h.b16 %v657
        %v703 = vunpack.c.l.b16 %v658
        %v704 = vunpack.c.h.b16 %v658
        %v705 = vunpack.c.l.b16 %v659
        %v706 = vunpack.c.h.b16 %v659
        %v707 = vunpack.c.l.b16 %v660
        %v708 = vunpack.c.h.b16 %v660
        %v709 = vunpack.c.l.b16 %v661
        %v710 = vunpack.c.h.b16 %v661
        %v711 = vunpack.c.l.b16 %v662
        %v712 = vunpack.c.h.b16 %v662
        %v713 = vunpack.c.l.b16 %v663
        %v714 = vunpack.c.h.b16 %v663
        %v715 = vpack.c.b16 %v701, %v699
        %v716 = vpack.c.b16 %v702, %v700
        %v717 = vpack.c.b16 %v705, %v703
        %v718 = vpack.c.b16 %v706, %v704
        %v719 = vpack.c.b16 %v709, %v707
        %v720 = vpack.c.b16 %v710, %v708
        %v721 = vpack.c.b16 %v713, %v711
        %v722 = vpack.c.b16 %v714, %v712
        %v732 = vsel %vm349, %v676, 0
        %v735 = vsel %vm349, %v678, 0
        %v738 = vsel %vm349, %v680, 0
        %v741 = vsel %vm349, %v682, 0
        %v744 = vsel %vm349, %v684, 0
        %v747 = vsel %vm349, %v686, 0
        %v750 = vsel %vm349, %v688, 0
        %v753 = vsel %vm349, %v690, 0
        %755 = vmatprep.subr.bf16.mxu0 %v716
        %756 = vmatpush1.bf16.msra.mxu0 %v715
        %757 = vmatprep.subr.bf16.mxu0 %v718
        %758 = vmatpush1.bf16.msra.mxu0 %v717
        %759 = vmatprep.subr.bf16.mxu0 %v720
        %760 = vmatpush1.bf16.msra.mxu0 %v719
        %761 = vmatprep.subr.bf16.mxu0 %v722
        %762 = vmatpush1.bf16.msra.mxu0 %v721
        %763 = vmatprep.subr.bf16.mxu0 0
        %764 = vmatpush1.bf16.msra.mxu0 0
        %765 = vmatprep.subr.bf16.mxu0 0
        %766 = vmatpush1.bf16.msra.mxu0 0
        %767 = vmatprep.subr.bf16.mxu0 0
        %768 = vmatpush1.bf16.msra.mxu0 0
        %769 = vmatprep.subr.bf16.mxu0 0
        %770 = vmatpush1.bf16.msra.mxu0 0
        %771 = vmatprep.subr.bf16.mxu0 0
        %772 = vmatpush1.bf16.msra.mxu0 0
        %773 = vmatprep.subr.bf16.mxu0 0
        %774 = vmatpush1.bf16.msra.mxu0 0
        %775 = vmatprep.subr.bf16.mxu0 0
        %776 = vmatpush1.bf16.msra.mxu0 0
        %777 = vmatprep.subr.bf16.mxu0 0
        %778 = vmatpush1.bf16.msra.mxu0 0
        %779 = vmatprep.subr.bf16.mxu0 0
        %780 = vmatpush1.bf16.msra.mxu0 0
        %781 = vmatprep.subr.bf16.mxu0 0
        %782 = vmatpush1.bf16.msra.mxu0 0
        %783 = vmatprep.subr.bf16.mxu0 0
        %784 = vmatpush1.bf16.msra.mxu0 0
        %785 = vmatprep.subr.bf16.mxu0 0
        %786 = vmatpush1.bf16.msra.mxu0 0
        %787 = vmatprep.mubr.bf16.mxu0 0
        %788 = vmatmul.mubr.bf16.gmra.mrb[0].mxu0 %v732
        %v789 = vpop.f32.mrb[0].mxu0
        %v790 = vadd.f32 0.0, %v789
        %v791 = vpop.f32.mrb[0].mxu0
        %v792 = vadd.f32 0.0, %v791
        %v793 = vpop.f32.mrb[0].mxu0
        %v794 = vadd.f32 0.0, %v793
        %v795 = vpop.f32.mrb[0].mxu0
        %v796 = vadd.f32 0.0, %v795
        %797 = vmatprep.mubr.bf16.mxu0 0
        %798 = vmatmul.mubr.bf16.gmra.mrb[0].mxu0 %v735
        %v799 = vpop.f32.mrb[0].mxu0
        %v800 = vadd.f32 0.0, %v799
        %v801 = vpop.f32.mrb[0].mxu0
        %v802 = vadd.f32 0.0, %v801
        %v803 = vpop.f32.mrb[0].mxu0
        %v804 = vadd.f32 0.0, %v803
        %v805 = vpop.f32.mrb[0].mxu0
        %v806 = vadd.f32 0.0, %v805
        %807 = vmatprep.mubr.bf16.mxu0 0
        %808 = vmatmul.mubr.bf16.gmra.mrb[0].mxu0 %v738
        %v809 = vpop.f32.mrb[0].mxu0
        %v810 = vadd.f32 0.0, %v809
        %v811 = vpop.f32.mrb[0].mxu0
        %v812 = vadd.f32 0.0, %v811
        %v813 = vpop.f32.mrb[0].mxu0
        %v814 = vadd.f32 0.0, %v813
        %v815 = vpop.f32.mrb[0].mxu0
        %v816 = vadd.f32 0.0, %v815
        %817 = vmatprep.mubr.bf16.mxu0 0
        %818 = vmatmul.mubr.bf16.gmra.mrb[0].mxu0 %v741
        %v819 = vpop.f32.mrb[0].mxu0
        %v820 = vadd.f32 0.0, %v819
        %v821 = vpop.f32.mrb[0].mxu0
        %v822 = vadd.f32 0.0, %v821
        %v823 = vpop.f32.mrb[0].mxu0
        %v824 = vadd.f32 0.0, %v823
        %v825 = vpop.f32.mrb[0].mxu0
        %v826 = vadd.f32 0.0, %v825
        %827 = vmatprep.mubr.bf16.mxu0 0
        %828 = vmatmul.mubr.bf16.gmra.mrb[0].mxu0 %v744
        %v829 = vpop.f32.mrb[0].mxu0
        %v830 = vadd.f32 0.0, %v829
        %v831 = vpop.f32.mrb[0].mxu0
        %v832 = vadd.f32 0.0, %v831
        %v833 = vpop.f32.mrb[0].mxu0
        %v834 = vadd.f32 0.0, %v833
        %v835 = vpop.f32.mrb[0].mxu0
        %v836 = vadd.f32 0.0, %v835
        %837 = vmatprep.mubr.bf16.mxu0 0
        %838 = vmatmul.mubr.bf16.gmra.mrb[0].mxu0 %v747
        %v839 = vpop.f32.mrb[0].mxu0
        %v840 = vadd.f32 0.0, %v839
        %v841 = vpop.f32.mrb[0].mxu0
        %v842 = vadd.f32 0.0, %v841
        %v843 = vpop.f32.mrb[0].mxu0
        %v844 = vadd.f32 0.0, %v843
        %v845 = vpop.f32.mrb[0].mxu0
        %v846 = vadd.f32 0.0, %v845
        %847 = vmatprep.mubr.bf16.mxu0 0
        %848 = vmatmul.mubr.bf16.gmra.mrb[0].mxu0 %v750
        %v849 = vpop.f32.mrb[0].mxu0
        %v850 = vadd.f32 0.0, %v849
        %v851 = vpop.f32.mrb[0].mxu0
        %v852 = vadd.f32 0.0, %v851
        %v853 = vpop.f32.mrb[0].mxu0
        %v854 = vadd.f32 0.0, %v853
        %v855 = vpop.f32.mrb[0].mxu0
        %v856 = vadd.f32 0.0, %v855
        %857 = vmatprep.mubr.bf16.mxu0 0
        %858 = vmatmul.mubr.bf16.gmra.mrb[0].mxu0 %v753
        %v859 = vpop.f32.mrb[0].mxu0
        %v860 = vadd.f32 0.0, %v859
        %v861 = vpop.f32.mrb[0].mxu0
        %v862 = vadd.f32 0.0, %v861
        %v863 = vpop.f32.mrb[0].mxu0
        %v864 = vadd.f32 0.0, %v863
        %v865 = vpop.f32.mrb[0].mxu0
        %v866 = vadd.f32 0.0, %v865
        %867 = vdwg.mxu0
        %v868 = vadd.f32 %v578, %v790
        %v869 = vadd.f32 %v580, %v792
        %v870 = vadd.f32 %v582, %v794
        %v871 = vadd.f32 %v584, %v796
        %v872 = vadd.f32 %v588, %v800
        %v873 = vadd.f32 %v590, %v802
        %v874 = vadd.f32 %v592, %v804
        %v875 = vadd.f32 %v594, %v806
        %v876 = vadd.f32 %v598, %v810
        %v877 = vadd.f32 %v600, %v812
        %v878 = vadd.f32 %v602, %v814
        %v879 = vadd.f32 %v604, %v816
        %v880 = vadd.f32 %v608, %v820
        %v881 = vadd.f32 %v610, %v822
        %v882 = vadd.f32 %v612, %v824
        %v883 = vadd.f32 %v614, %v826
        %v884 = vadd.f32 %v618, %v830
        %v885 = vadd.f32 %v620, %v832
        %v886 = vadd.f32 %v622, %v834
        %v887 = vadd.f32 %v624, %v836
        %v888 = vadd.f32 %v628, %v840
        %v889 = vadd.f32 %v630, %v842
        %v890 = vadd.f32 %v632, %v844
        %v891 = vadd.f32 %v634, %v846
        %v892 = vadd.f32 %v638, %v850
        %v893 = vadd.f32 %v640, %v852
        %v894 = vadd.f32 %v642, %v854
        %v895 = vadd.f32 %v644, %v856
        %v896 = vadd.f32 %v648, %v860
        %v897 = vadd.f32 %v650, %v862
        %v898 = vadd.f32 %v652, %v864
        %v899 = vadd.f32 %v654, %v866
        %v900 = vld [vmem:[%s1 + $0xc0] sm:$0xff]
        %v901 = vld [vmem:[%s1 + $0xc8] sm:$0xff]
        %v902 = vld [vmem:[%s1 + $0xd0] sm:$0xff]
        %v903 = vld [vmem:[%s1 + $0xd8] sm:$0xff]
        %v904 = vld [vmem:[%s1 + $0xe0] sm:$0xff]
        %v905 = vld [vmem:[%s1 + $0xe8] sm:$0xff]
        %v906 = vld [vmem:[%s1 + $0xf0] sm:$0xff]
        %v907 = vld [vmem:[%s1 + $0xf8] sm:$0xff]
        %vm908 = vsmask.f32 6400
        %v909 = vrot.slane %v242, 1
        %v910 = vrot.slane %v244, 2
        %v911 = vor.u32 %v909, %v910
        %v912 = vrot.slane %v253, 1
        %v913 = vrot.slane %v249, 2
        %v914 = vor.u32 %v912, %v913
        %v915 = vsel %vm908, %v911, %v914
        %v916 = vrot.slane %v261, 1
        %v917 = vrot.slane %v257, 2
        %v918 = vor.u32 %v916, %v917
        %v919 = vsel %vm908, %v914, %v918
        %v920 = vrot.slane %v269, 1
        %v921 = vrot.slane %v265, 2
        %v922 = vor.u32 %v920, %v921
        %v923 = vsel %vm908, %v918, %v922
        %v924 = vrot.slane %v277, 1
        %v925 = vrot.slane %v273, 2
        %v926 = vor.u32 %v924, %v925
        %v927 = vsel %vm908, %v922, %v926
        %v928 = vrot.slane %v285, 1
        %v929 = vrot.slane %v281, 2
        %v930 = vor.u32 %v928, %v929
        %v931 = vsel %vm908, %v926, %v930
        %v932 = vrot.slane %v293, 1
        %v933 = vrot.slane %v289, 2
        %v934 = vor.u32 %v932, %v933
        %v935 = vsel %vm908, %v930, %v934
        %v936 = vrot.slane %v301, 1
        %v937 = vrot.slane %v297, 2
        %v938 = vor.u32 %v936, %v937
        %v939 = vsel %vm908, %v934, %v938
        %v940 = vshrl.u32 %v231, 16
        %v942 = vrot.slane %v940, 1
        %v943 = vrot.slane %v305, 2
        %v944 = vor.u32 %v942, %v943
        %v945 = vsel %vm908, %v938, %v944
        %v954 = vunpack.c.l.b16 %v900
        %v955 = vunpack.c.h.b16 %v900
        %v956 = vunpack.c.l.b16 %v901
        %v957 = vunpack.c.h.b16 %v901
        %v958 = vunpack.c.l.b16 %v902
        %v959 = vunpack.c.h.b16 %v902
        %v960 = vunpack.c.l.b16 %v903
        %v961 = vunpack.c.h.b16 %v903
        %v962 = vunpack.c.l.b16 %v904
        %v963 = vunpack.c.h.b16 %v904
        %v964 = vunpack.c.l.b16 %v905
        %v965 = vunpack.c.h.b16 %v905
        %v966 = vunpack.c.l.b16 %v906
        %v967 = vunpack.c.h.b16 %v906
        %v968 = vunpack.c.l.b16 %v907
        %v969 = vunpack.c.h.b16 %v907
        %v970 = vpack.c.b16 %v956, %v954
        %v971 = vpack.c.b16 %v957, %v955
        %v972 = vpack.c.b16 %v960, %v958
        %v973 = vpack.c.b16 %v961, %v959
        %v974 = vpack.c.b16 %v964, %v962
        %v975 = vpack.c.b16 %v965, %v963
        %v976 = vpack.c.b16 %v968, %v966
        %v977 = vpack.c.b16 %v969, %v967
        %v987 = vsel %vm349, %v915, 0
        %v990 = vsel %vm349, %v919, 0
        %v993 = vsel %vm349, %v923, 0
        %v996 = vsel %vm349, %v927, 0
        %v999 = vsel %vm349, %v931, 0
        %v1002 = vsel %vm349, %v935, 0
        %v1005 = vsel %vm349, %v939, 0
        %v1008 = vsel %vm349, %v945, 0
        %1010 = vmatprep.subr.bf16.mxu0 %v971
        %1011 = vmatpush1.bf16.msra.mxu0 %v970
        %1012 = vmatprep.subr.bf16.mxu0 %v973
        %1013 = vmatpush1.bf16.msra.mxu0 %v972
        %1014 = vmatprep.subr.bf16.mxu0 %v975
        %1015 = vmatpush1.bf16.msra.mxu0 %v974
        %1016 = vmatprep.subr.bf16.mxu0 %v977
        %1017 = vmatpush1.bf16.msra.mxu0 %v976
        %1018 = vmatprep.subr.bf16.mxu0 0
        %1019 = vmatpush1.bf16.msra.mxu0 0
        %1020 = vmatprep.subr.bf16.mxu0 0
        %1021 = vmatpush1.bf16.msra.mxu0 0
        %1022 = vmatprep.subr.bf16.mxu0 0
        %1023 = vmatpush1.bf16.msra.mxu0 0
        %1024 = vmatprep.subr.bf16.mxu0 0
        %1025 = vmatpush1.bf16.msra.mxu0 0
        %1026 = vmatprep.subr.bf16.mxu0 0
        %1027 = vmatpush1.bf16.msra.mxu0 0
        %1028 = vmatprep.subr.bf16.mxu0 0
        %1029 = vmatpush1.bf16.msra.mxu0 0
        %1030 = vmatprep.subr.bf16.mxu0 0
        %1031 = vmatpush1.bf16.msra.mxu0 0
        %1032 = vmatprep.subr.bf16.mxu0 0
        %1033 = vmatpush1.bf16.msra.mxu0 0
        %1034 = vmatprep.subr.bf16.mxu0 0
        %1035 = vmatpush1.bf16.msra.mxu0 0
        %1036 = vmatprep.subr.bf16.mxu0 0
        %1037 = vmatpush1.bf16.msra.mxu0 0
        %1038 = vmatprep.subr.bf16.mxu0 0
        %1039 = vmatpush1.bf16.msra.mxu0 0
        %1040 = vmatprep.subr.bf16.mxu0 0
        %1041 = vmatpush1.bf16.msra.mxu0 0
        %1042 = vmatprep.mubr.bf16.mxu0 0
        %1043 = vmatmul.mubr.bf16.gmra.mrb[0].mxu0 %v987
        %v1044 = vpop.f32.mrb[0].mxu0
        %v1045 = vadd.f32 0.0, %v1044
        %v1046 = vpop.f32.mrb[0].mxu0
        %v1047 = vadd.f32 0.0, %v1046
        %v1048 = vpop.f32.mrb[0].mxu0
        %v1049 = vadd.f32 0.0, %v1048
        %v1050 = vpop.f32.mrb[0].mxu0
        %v1051 = vadd.f32 0.0, %v1050
        %1052 = vmatprep.mubr.bf16.mxu0 0
        %1053 = vmatmul.mubr.bf16.gmra.mrb[0].mxu0 %v990
        %v1054 = vpop.f32.mrb[0].mxu0
        %v1055 = vadd.f32 0.0, %v1054
        %v1056 = vpop.f32.mrb[0].mxu0
        %v1057 = vadd.f32 0.0, %v1056
        %v1058 = vpop.f32.mrb[0].mxu0
        %v1059 = vadd.f32 0.0, %v1058
        %v1060 = vpop.f32.mrb[0].mxu0
        %v1061 = vadd.f32 0.0, %v1060
        %1062 = vmatprep.mubr.bf16.mxu0 0
        %1063 = vmatmul.mubr.bf16.gmra.mrb[0].mxu0 %v993
        %v1064 = vpop.f32.mrb[0].mxu0
        %v1065 = vadd.f32 0.0, %v1064
        %v1066 = vpop.f32.mrb[0].mxu0
        %v1067 = vadd.f32 0.0, %v1066
        %v1068 = vpop.f32.mrb[0].mxu0
        %v1069 = vadd.f32 0.0, %v1068
        %v1070 = vpop.f32.mrb[0].mxu0
        %v1071 = vadd.f32 0.0, %v1070
        %1072 = vmatprep.mubr.bf16.mxu0 0
        %1073 = vmatmul.mubr.bf16.gmra.mrb[0].mxu0 %v996
        %v1074 = vpop.f32.mrb[0].mxu0
        %v1075 = vadd.f32 0.0, %v1074
        %v1076 = vpop.f32.mrb[0].mxu0
        %v1077 = vadd.f32 0.0, %v1076
        %v1078 = vpop.f32.mrb[0].mxu0
        %v1079 = vadd.f32 0.0, %v1078
        %v1080 = vpop.f32.mrb[0].mxu0
        %v1081 = vadd.f32 0.0, %v1080
        %1082 = vmatprep.mubr.bf16.mxu0 0
        %1083 = vmatmul.mubr.bf16.gmra.mrb[0].mxu0 %v999
        %v1084 = vpop.f32.mrb[0].mxu0
        %v1085 = vadd.f32 0.0, %v1084
        %v1086 = vpop.f32.mrb[0].mxu0
        %v1087 = vadd.f32 0.0, %v1086
        %v1088 = vpop.f32.mrb[0].mxu0
        %v1089 = vadd.f32 0.0, %v1088
        %v1090 = vpop.f32.mrb[0].mxu0
        %v1091 = vadd.f32 0.0, %v1090
        %1092 = vmatprep.mubr.bf16.mxu0 0
        %1093 = vmatmul.mubr.bf16.gmra.mrb[0].mxu0 %v1002
        %v1094 = vpop.f32.mrb[0].mxu0
        %v1095 = vadd.f32 0.0, %v1094
        %v1096 = vpop.f32.mrb[0].mxu0
        %v1097 = vadd.f32 0.0, %v1096
        %v1098 = vpop.f32.mrb[0].mxu0
        %v1099 = vadd.f32 0.0, %v1098
        %v1100 = vpop.f32.mrb[0].mxu0
        %v1101 = vadd.f32 0.0, %v1100
        %1102 = vmatprep.mubr.bf16.mxu0 0
        %1103 = vmatmul.mubr.bf16.gmra.mrb[0].mxu0 %v1005
        %v1104 = vpop.f32.mrb[0].mxu0
        %v1105 = vadd.f32 0.0, %v1104
        %v1106 = vpop.f32.mrb[0].mxu0
        %v1107 = vadd.f32 0.0, %v1106
        %v1108 = vpop.f32.mrb[0].mxu0
        %v1109 = vadd.f32 0.0, %v1108
        %v1110 = vpop.f32.mrb[0].mxu0
        %v1111 = vadd.f32 0.0, %v1110
        %1112 = vmatprep.mubr.bf16.mxu0 0
        %1113 = vmatmul.mubr.bf16.gmra.mrb[0].mxu0 %v1008
        %v1114 = vpop.f32.mrb[0].mxu0
        %v1115 = vadd.f32 0.0, %v1114
        %v1116 = vpop.f32.mrb[0].mxu0
        %v1117 = vadd.f32 0.0, %v1116
        %v1118 = vpop.f32.mrb[0].mxu0
        %v1119 = vadd.f32 0.0, %v1118
        %v1120 = vpop.f32.mrb[0].mxu0
        %v1121 = vadd.f32 0.0, %v1120
        %1122 = vdwg.mxu0
        %v1123 = vadd.f32 %v868, %v1045
        %v1124 = vadd.f32 %v869, %v1047
        %v1125 = vadd.f32 %v870, %v1049
        %v1126 = vadd.f32 %v871, %v1051
        %v1127 = vadd.f32 %v872, %v1055
        %v1128 = vadd.f32 %v873, %v1057
        %v1129 = vadd.f32 %v874, %v1059
        %v1130 = vadd.f32 %v875, %v1061
        %v1131 = vadd.f32 %v876, %v1065
        %v1132 = vadd.f32 %v877, %v1067
        %v1133 = vadd.f32 %v878, %v1069
        %v1134 = vadd.f32 %v879, %v1071
        %v1135 = vadd.f32 %v880, %v1075
        %v1136 = vadd.f32 %v881, %v1077
        %v1137 = vadd.f32 %v882, %v1079
        %v1138 = vadd.f32 %v883, %v1081
        %v1139 = vadd.f32 %v884, %v1085
        %v1140 = vadd.f32 %v885, %v1087
        %v1141 = vadd.f32 %v886, %v1089
        %v1142 = vadd.f32 %v887, %v1091
        %v1143 = vadd.f32 %v888, %v1095
        %v1144 = vadd.f32 %v889, %v1097
        %v1145 = vadd.f32 %v890, %v1099
        %v1146 = vadd.f32 %v891, %v1101
        %v1147 = vadd.f32 %v892, %v1105
        %v1148 = vadd.f32 %v893, %v1107
        %v1149 = vadd.f32 %v894, %v1109
        %v1150 = vadd.f32 %v895, %v1111
        %v1151 = vadd.f32 %v896, %v1115
        %v1152 = vadd.f32 %v897, %v1117
        %v1153 = vadd.f32 %v898, %v1119
        %v1154 = vadd.f32 %v899, %v1121
        %v1155 = vmul.f32 %v1123, %v1123
        %v1156 = vmul.f32 %v1125, %v1125
        %v1157 = vmul.f32 %v1127, %v1127
        %v1158 = vmul.f32 %v1129, %v1129
        %v1159 = vmul.f32 %v1131, %v1131
        %v1160 = vmul.f32 %v1133, %v1133
        %v1161 = vmul.f32 %v1135, %v1135
        %v1162 = vmul.f32 %v1137, %v1137
        %v1163 = vmul.f32 %v1139, %v1139
        %v1164 = vmul.f32 %v1141, %v1141
        %v1165 = vmul.f32 %v1143, %v1143
        %v1166 = vmul.f32 %v1145, %v1145
        %v1167 = vmul.f32 %v1147, %v1147
        %v1168 = vmul.f32 %v1149, %v1149
        %v1169 = vmul.f32 %v1151, %v1151
        %v1170 = vmul.f32 %v1153, %v1153
        %v1171 = vmul.f32 %v1124, %v1124
        %v1172 = vmul.f32 %v1126, %v1126
        %v1173 = vmul.f32 %v1128, %v1128
        %v1174 = vmul.f32 %v1130, %v1130
        %v1175 = vmul.f32 %v1132, %v1132
        %v1176 = vmul.f32 %v1134, %v1134
        %v1177 = vmul.f32 %v1136, %v1136
        %v1178 = vmul.f32 %v1138, %v1138
        %v1179 = vmul.f32 %v1140, %v1140
        %v1180 = vmul.f32 %v1142, %v1142
        %v1181 = vmul.f32 %v1144, %v1144
        %v1182 = vmul.f32 %v1146, %v1146
        %v1183 = vmul.f32 %v1148, %v1148
        %v1184 = vmul.f32 %v1150, %v1150
        %v1185 = vmul.f32 %v1152, %v1152
        %v1186 = vmul.f32 %v1154, %v1154
        %v1187 = vadd.f32 %v1155, %v1171
        %v1188 = vadd.f32 %v1156, %v1172
        %v1189 = vadd.f32 %v1157, %v1173
        %v1190 = vadd.f32 %v1158, %v1174
        %v1191 = vadd.f32 %v1159, %v1175
        %v1192 = vadd.f32 %v1160, %v1176
        %v1193 = vadd.f32 %v1161, %v1177
        %v1194 = vadd.f32 %v1162, %v1178
        %v1195 = vadd.f32 %v1163, %v1179
        %v1196 = vadd.f32 %v1164, %v1180
        %v1197 = vadd.f32 %v1165, %v1181
        %v1198 = vadd.f32 %v1166, %v1182
        %v1199 = vadd.f32 %v1167, %v1183
        %v1200 = vadd.f32 %v1168, %v1184
        %v1201 = vadd.f32 %v1169, %v1185
        %v1202 = vadd.f32 %v1170, %v1186
        %v1203 = vrsqrt.pop %v1187
        %v1204 = vmul.f32 %v1187, %v1203
        %vm1205 = vcmp.eq.f32.partialorder %v1187, inf
        %v1206 = vsel %vm1205, %v1187, %v1204
        %vm1207 = vcmp.eq.f32.partialorder %v1187, 0.0
        %v1208 = vand.u32 %v1187, 2147483648
        %v1209 = vsel %vm1207, %v1208, %v1206
        %v1210 = vrsqrt.pop %v1188
        %v1211 = vmul.f32 %v1188, %v1210
        %vm1212 = vcmp.eq.f32.partialorder %v1188, inf
        %v1213 = vsel %vm1212, %v1188, %v1211
        %vm1214 = vcmp.eq.f32.partialorder %v1188, 0.0
        %v1215 = vand.u32 %v1188, 2147483648
        %v1216 = vsel %vm1214, %v1215, %v1213
        %v1217 = vrsqrt.pop %v1189
        %v1218 = vmul.f32 %v1189, %v1217
        %vm1219 = vcmp.eq.f32.partialorder %v1189, inf
        %v1220 = vsel %vm1219, %v1189, %v1218
        %vm1221 = vcmp.eq.f32.partialorder %v1189, 0.0
        %v1222 = vand.u32 %v1189, 2147483648
        %v1223 = vsel %vm1221, %v1222, %v1220
        %v1224 = vrsqrt.pop %v1190
        %v1225 = vmul.f32 %v1190, %v1224
        %vm1226 = vcmp.eq.f32.partialorder %v1190, inf
        %v1227 = vsel %vm1226, %v1190, %v1225
        %vm1228 = vcmp.eq.f32.partialorder %v1190, 0.0
        %v1229 = vand.u32 %v1190, 2147483648
        %v1230 = vsel %vm1228, %v1229, %v1227
        %v1231 = vrsqrt.pop %v1191
        %v1232 = vmul.f32 %v1191, %v1231
        %vm1233 = vcmp.eq.f32.partialorder %v1191, inf
        %v1234 = vsel %vm1233, %v1191, %v1232
        %vm1235 = vcmp.eq.f32.partialorder %v1191, 0.0
        %v1236 = vand.u32 %v1191, 2147483648
        %v1237 = vsel %vm1235, %v1236, %v1234
        %v1238 = vrsqrt.pop %v1192
        %v1239 = vmul.f32 %v1192, %v1238
        %vm1240 = vcmp.eq.f32.partialorder %v1192, inf
        %v1241 = vsel %vm1240, %v1192, %v1239
        %vm1242 = vcmp.eq.f32.partialorder %v1192, 0.0
        %v1243 = vand.u32 %v1192, 2147483648
        %v1244 = vsel %vm1242, %v1243, %v1241
        %v1245 = vrsqrt.pop %v1193
        %v1246 = vmul.f32 %v1193, %v1245
        %vm1247 = vcmp.eq.f32.partialorder %v1193, inf
        %v1248 = vsel %vm1247, %v1193, %v1246
        %vm1249 = vcmp.eq.f32.partialorder %v1193, 0.0
        %v1250 = vand.u32 %v1193, 2147483648
        %v1251 = vsel %vm1249, %v1250, %v1248
        %v1252 = vrsqrt.pop %v1194
        %v1253 = vmul.f32 %v1194, %v1252
        %vm1254 = vcmp.eq.f32.partialorder %v1194, inf
        %v1255 = vsel %vm1254, %v1194, %v1253
        %vm1256 = vcmp.eq.f32.partialorder %v1194, 0.0
        %v1257 = vand.u32 %v1194, 2147483648
        %v1258 = vsel %vm1256, %v1257, %v1255
        %v1259 = vrsqrt.pop %v1195
        %v1260 = vmul.f32 %v1195, %v1259
        %vm1261 = vcmp.eq.f32.partialorder %v1195, inf
        %v1262 = vsel %vm1261, %v1195, %v1260
        %vm1263 = vcmp.eq.f32.partialorder %v1195, 0.0
        %v1264 = vand.u32 %v1195, 2147483648
        %v1265 = vsel %vm1263, %v1264, %v1262
        %v1266 = vrsqrt.pop %v1196
        %v1267 = vmul.f32 %v1196, %v1266
        %vm1268 = vcmp.eq.f32.partialorder %v1196, inf
        %v1269 = vsel %vm1268, %v1196, %v1267
        %vm1270 = vcmp.eq.f32.partialorder %v1196, 0.0
        %v1271 = vand.u32 %v1196, 2147483648
        %v1272 = vsel %vm1270, %v1271, %v1269
        %v1273 = vrsqrt.pop %v1197
        %v1274 = vmul.f32 %v1197, %v1273
        %vm1275 = vcmp.eq.f32.partialorder %v1197, inf
        %v1276 = vsel %vm1275, %v1197, %v1274
        %vm1277 = vcmp.eq.f32.partialorder %v1197, 0.0
        %v1278 = vand.u32 %v1197, 2147483648
        %v1279 = vsel %vm1277, %v1278, %v1276
        %v1280 = vrsqrt.pop %v1198
        %v1281 = vmul.f32 %v1198, %v1280
        %vm1282 = vcmp.eq.f32.partialorder %v1198, inf
        %v1283 = vsel %vm1282, %v1198, %v1281
        %vm1284 = vcmp.eq.f32.partialorder %v1198, 0.0
        %v1285 = vand.u32 %v1198, 2147483648
        %v1286 = vsel %vm1284, %v1285, %v1283
        %v1287 = vrsqrt.pop %v1199
        %v1288 = vmul.f32 %v1199, %v1287
        %vm1289 = vcmp.eq.f32.partialorder %v1199, inf
        %v1290 = vsel %vm1289, %v1199, %v1288
        %vm1291 = vcmp.eq.f32.partialorder %v1199, 0.0
        %v1292 = vand.u32 %v1199, 2147483648
        %v1293 = vsel %vm1291, %v1292, %v1290
        %v1294 = vrsqrt.pop %v1200
        %v1295 = vmul.f32 %v1200, %v1294
        %vm1296 = vcmp.eq.f32.partialorder %v1200, inf
        %v1297 = vsel %vm1296, %v1200, %v1295
        %vm1298 = vcmp.eq.f32.partialorder %v1200, 0.0
        %v1299 = vand.u32 %v1200, 2147483648
        %v1300 = vsel %vm1298, %v1299, %v1297
        %v1301 = vrsqrt.pop %v1201
        %v1302 = vmul.f32 %v1201, %v1301
        %vm1303 = vcmp.eq.f32.partialorder %v1201, inf
        %v1304 = vsel %vm1303, %v1201, %v1302
        %vm1305 = vcmp.eq.f32.partialorder %v1201, 0.0
        %v1306 = vand.u32 %v1201, 2147483648
        %v1307 = vsel %vm1305, %v1306, %v1304
        %v1308 = vrsqrt.pop %v1202
        %v1309 = vmul.f32 %v1202, %v1308
        %vm1310 = vcmp.eq.f32.partialorder %v1202, inf
        %v1311 = vsel %vm1310, %v1202, %v1309
        %vm1312 = vcmp.eq.f32.partialorder %v1202, 0.0
        %v1313 = vand.u32 %v1202, 2147483648
        %v1314 = vsel %vm1312, %v1313, %v1311
        %v1315 = vpack.c.bf16 %v1216, %v1209
        %v1316 = vpack.c.bf16 %v1230, %v1223
        %v1317 = vpack.c.bf16 %v1244, %v1237
        %v1318 = vpack.c.bf16 %v1258, %v1251
        %v1319 = vpack.c.bf16 %v1272, %v1265
        %v1320 = vpack.c.bf16 %v1286, %v1279
        %v1321 = vpack.c.bf16 %v1300, %v1293
        %v1322 = vpack.c.bf16 %v1314, %v1307
        %v1323 = vld [vmem:[%s2] sm:$0xf]
        %v1324 = vld [vmem:[%s2 + $0x4] sm:$0xf]
        %v1325 = vld [vmem:[%s2 + $0x8] sm:$0xf]
        %v1326 = vld [vmem:[%s2 + $0xc] sm:$0xf]
        %v1327 = vld [vmem:[%s2 + $0x10] sm:$0xf]
        %v1328 = vld [vmem:[%s2 + $0x14] sm:$0xf]
        %v1329 = vld [vmem:[%s2 + $0x18] sm:$0xf]
        %v1330 = vld [vmem:[%s2 + $0x1c] sm:$0xf]
        %v1331 = vld [vmem:[%s2 + $0x20] sm:$0xf]
        %v1332 = vld [vmem:[%s2 + $0x24] sm:$0xf]
        %v1333 = vld [vmem:[%s2 + $0x28] sm:$0xf]
        %v1334 = vld [vmem:[%s2 + $0x2c] sm:$0xf]
        %v1335 = vld [vmem:[%s2 + $0x30] sm:$0xf]
        %v1336 = vld [vmem:[%s2 + $0x34] sm:$0xf]
        %v1337 = vld [vmem:[%s2 + $0x38] sm:$0xf]
        %v1338 = vld [vmem:[%s2 + $0x3c] sm:$0xf]
        %v1355 = vunpack.c.l.b16 %v1323
        %v1356 = vunpack.c.l.b16 %v1324
        %v1357 = vunpack.c.l.b16 %v1325
        %v1358 = vunpack.c.l.b16 %v1326
        %v1359 = vunpack.c.l.b16 %v1327
        %v1360 = vunpack.c.l.b16 %v1328
        %v1361 = vunpack.c.l.b16 %v1329
        %v1362 = vunpack.c.l.b16 %v1330
        %v1363 = vunpack.c.l.b16 %v1331
        %v1364 = vunpack.c.l.b16 %v1332
        %v1365 = vunpack.c.l.b16 %v1333
        %v1366 = vunpack.c.l.b16 %v1334
        %v1367 = vunpack.c.l.b16 %v1335
        %v1368 = vunpack.c.l.b16 %v1336
        %v1369 = vunpack.c.l.b16 %v1337
        %v1370 = vunpack.c.l.b16 %v1338
        %v1371 = vpack.c.b16 %v1356, %v1355
        %v1372 = vpack.c.b16 %v1358, %v1357
        %v1373 = vpack.c.b16 %v1360, %v1359
        %v1374 = vpack.c.b16 %v1362, %v1361
        %v1375 = vpack.c.b16 %v1364, %v1363
        %v1376 = vpack.c.b16 %v1366, %v1365
        %v1377 = vpack.c.b16 %v1368, %v1367
        %v1378 = vpack.c.b16 %v1370, %v1369
        %1387 = vmatprep.subr.bf16.mxu0 0
        %1388 = vmatpush1.bf16.msra.mxu0 %v1371
        %1389 = vmatprep.subr.bf16.mxu0 0
        %1390 = vmatpush1.bf16.msra.mxu0 %v1372
        %1391 = vmatprep.subr.bf16.mxu0 0
        %1392 = vmatpush1.bf16.msra.mxu0 %v1373
        %1393 = vmatprep.subr.bf16.mxu0 0
        %1394 = vmatpush1.bf16.msra.mxu0 %v1374
        %1395 = vmatprep.subr.bf16.mxu0 0
        %1396 = vmatpush1.bf16.msra.mxu0 %v1375
        %1397 = vmatprep.subr.bf16.mxu0 0
        %1398 = vmatpush1.bf16.msra.mxu0 %v1376
        %1399 = vmatprep.subr.bf16.mxu0 0
        %1400 = vmatpush1.bf16.msra.mxu0 %v1377
        %1401 = vmatprep.subr.bf16.mxu0 0
        %1402 = vmatpush1.bf16.msra.mxu0 %v1378
        %1403 = vmatprep.subr.bf16.mxu0 0
        %1404 = vmatpush1.bf16.msra.mxu0 0
        %1405 = vmatprep.subr.bf16.mxu0 0
        %1406 = vmatpush1.bf16.msra.mxu0 0
        %1407 = vmatprep.subr.bf16.mxu0 0
        %1408 = vmatpush1.bf16.msra.mxu0 0
        %1409 = vmatprep.subr.bf16.mxu0 0
        %1410 = vmatpush1.bf16.msra.mxu0 0
        %1411 = vmatprep.subr.bf16.mxu0 0
        %1412 = vmatpush1.bf16.msra.mxu0 0
        %1413 = vmatprep.subr.bf16.mxu0 0
        %1414 = vmatpush1.bf16.msra.mxu0 0
        %1415 = vmatprep.subr.bf16.mxu0 0
        %1416 = vmatpush1.bf16.msra.mxu0 0
        %1417 = vmatprep.subr.bf16.mxu0 0
        %1418 = vmatpush1.bf16.msra.mxu0 0
        %1419 = vmatprep.mubr.bf16.mxu0 0
        %1420 = vmatmul.mubr.bf16.gmra.mrb[0].mxu0 %v1315
        %v1421 = vpop.f32.mrb[0].mxu0
        %v1422 = vadd.f32 0.0, %v1421
        %v1423 = vpop.f32.mrb[0].mxu0
        %v1424 = vpop.f32.mrb[0].mxu0
        %v1425 = vadd.f32 0.0, %v1424
        %v1426 = vpop.f32.mrb[0].mxu0
        %1427 = vmatprep.mubr.bf16.mxu0 0
        %1428 = vmatmul.mubr.bf16.gmra.mrb[0].mxu0 %v1316
        %v1429 = vpop.f32.mrb[0].mxu0
        %v1430 = vadd.f32 0.0, %v1429
        %v1431 = vpop.f32.mrb[0].mxu0
        %v1432 = vpop.f32.mrb[0].mxu0
        %v1433 = vadd.f32 0.0, %v1432
        %v1434 = vpop.f32.mrb[0].mxu0
        %1435 = vmatprep.mubr.bf16.mxu0 0
        %1436 = vmatmul.mubr.bf16.gmra.mrb[0].mxu0 %v1317
        %v1437 = vpop.f32.mrb[0].mxu0
        %v1438 = vadd.f32 0.0, %v1437
        %v1439 = vpop.f32.mrb[0].mxu0
        %v1440 = vpop.f32.mrb[0].mxu0
        %v1441 = vadd.f32 0.0, %v1440
        %v1442 = vpop.f32.mrb[0].mxu0
        %1443 = vmatprep.mubr.bf16.mxu0 0
        %1444 = vmatmul.mubr.bf16.gmra.mrb[0].mxu0 %v1318
        %v1445 = vpop.f32.mrb[0].mxu0
        %v1446 = vadd.f32 0.0, %v1445
        %v1447 = vpop.f32.mrb[0].mxu0
        %v1448 = vpop.f32.mrb[0].mxu0
        %v1449 = vadd.f32 0.0, %v1448
        %v1450 = vpop.f32.mrb[0].mxu0
        %1451 = vmatprep.mubr.bf16.mxu0 0
        %1452 = vmatmul.mubr.bf16.gmra.mrb[0].mxu0 %v1319
        %v1453 = vpop.f32.mrb[0].mxu0
        %v1454 = vadd.f32 0.0, %v1453
        %v1455 = vpop.f32.mrb[0].mxu0
        %v1456 = vpop.f32.mrb[0].mxu0
        %v1457 = vadd.f32 0.0, %v1456
        %v1458 = vpop.f32.mrb[0].mxu0
        %1459 = vmatprep.mubr.bf16.mxu0 0
        %1460 = vmatmul.mubr.bf16.gmra.mrb[0].mxu0 %v1320
        %v1461 = vpop.f32.mrb[0].mxu0
        %v1462 = vadd.f32 0.0, %v1461
        %v1463 = vpop.f32.mrb[0].mxu0
        %v1464 = vpop.f32.mrb[0].mxu0
        %v1465 = vadd.f32 0.0, %v1464
        %v1466 = vpop.f32.mrb[0].mxu0
        %1467 = vmatprep.mubr.bf16.mxu0 0
        %1468 = vmatmul.mubr.bf16.gmra.mrb[0].mxu0 %v1321
        %v1469 = vpop.f32.mrb[0].mxu0
        %v1470 = vadd.f32 0.0, %v1469
        %v1471 = vpop.f32.mrb[0].mxu0
        %v1472 = vpop.f32.mrb[0].mxu0
        %v1473 = vadd.f32 0.0, %v1472
        %v1474 = vpop.f32.mrb[0].mxu0
        %1475 = vmatprep.mubr.bf16.mxu0 0
        %1476 = vmatmul.mubr.bf16.gmra.mrb[0].mxu0 %v1322
        %v1477 = vpop.f32.mrb[0].mxu0
        %v1478 = vadd.f32 0.0, %v1477
        %v1479 = vpop.f32.mrb[0].mxu0
        %v1480 = vpop.f32.mrb[0].mxu0
        %v1481 = vadd.f32 0.0, %v1480
        %v1482 = vpop.f32.mrb[0].mxu0
        %1483 = vdwg.mxu0
        %v1484 = vmax.f32 %v1422, 1e-05
        %v1485 = vmax.f32 %v1425, 1e-05
        %v1486 = vmax.f32 %v1430, 1e-05
        %v1487 = vmax.f32 %v1433, 1e-05
        %v1488 = vmax.f32 %v1438, 1e-05
        %v1489 = vmax.f32 %v1441, 1e-05
        %v1490 = vmax.f32 %v1446, 1e-05
        %v1491 = vmax.f32 %v1449, 1e-05
        %v1492 = vmax.f32 %v1454, 1e-05
        %v1493 = vmax.f32 %v1457, 1e-05
        %v1494 = vmax.f32 %v1462, 1e-05
        %v1495 = vmax.f32 %v1465, 1e-05
        %v1496 = vmax.f32 %v1470, 1e-05
        %v1497 = vmax.f32 %v1473, 1e-05
        %v1498 = vmax.f32 %v1478, 1e-05
        %v1499 = vmax.f32 %v1481, 1e-05
        %v1500 = vlog2.pop %v1484
        %v1501 = vmul.f32 %v1500, 0.6931472
        %v1502 = vlog2.pop %v1485
        %v1503 = vmul.f32 %v1502, 0.6931472
        %v1504 = vlog2.pop %v1486
        %v1505 = vmul.f32 %v1504, 0.6931472
        %v1506 = vlog2.pop %v1487
        %v1507 = vmul.f32 %v1506, 0.6931472
        %v1508 = vlog2.pop %v1488
        %v1509 = vmul.f32 %v1508, 0.6931472
        %v1510 = vlog2.pop %v1489
        %v1511 = vmul.f32 %v1510, 0.6931472
        %v1512 = vlog2.pop %v1490
        %v1513 = vmul.f32 %v1512, 0.6931472
        %v1514 = vlog2.pop %v1491
        %v1515 = vmul.f32 %v1514, 0.6931472
        %v1516 = vlog2.pop %v1492
        %v1517 = vmul.f32 %v1516, 0.6931472
        %v1518 = vlog2.pop %v1493
        %v1519 = vmul.f32 %v1518, 0.6931472
        %v1520 = vlog2.pop %v1494
        %v1521 = vmul.f32 %v1520, 0.6931472
        %v1522 = vlog2.pop %v1495
        %v1523 = vmul.f32 %v1522, 0.6931472
        %v1524 = vlog2.pop %v1496
        %v1525 = vmul.f32 %v1524, 0.6931472
        %v1526 = vlog2.pop %v1497
        %v1527 = vmul.f32 %v1526, 0.6931472
        %v1528 = vlog2.pop %v1498
        %v1529 = vmul.f32 %v1528, 0.6931472
        %v1530 = vlog2.pop %v1499
        %v1531 = vmul.f32 %v1530, 0.6931472
        %1532 = vxpose.xlu0.b32.start [1/16] %v1501, 128
        %1533 = vxpose.xlu0.b32.cont [2/16] %v1503, 128
        %1534 = vxpose.xlu0.b32.cont [3/16] %v1505, 128
        %1535 = vxpose.xlu0.b32.cont [4/16] %v1507, 128
        %1536 = vxpose.xlu0.b32.cont [5/16] %v1509, 128
        %1537 = vxpose.xlu0.b32.cont [6/16] %v1511, 128
        %1538 = vxpose.xlu0.b32.cont [7/16] %v1513, 128
        %1539 = vxpose.xlu0.b32.cont [8/16] %v1515, 128
        %1540 = vxpose.xlu0.b32.cont [9/16] %v1517, 128
        %1541 = vxpose.xlu0.b32.cont [10/16] %v1519, 128
        %1542 = vxpose.xlu0.b32.cont [11/16] %v1521, 128
        %1543 = vxpose.xlu0.b32.cont [12/16] %v1523, 128
        %1544 = vxpose.xlu0.b32.cont [13/16] %v1525, 128
        %1545 = vxpose.xlu0.b32.cont [14/16] %v1527, 128
        %1546 = vxpose.xlu0.b32.cont [15/16] %v1529, 128
        %1547 = vxpose.xlu0.b32.end [16/16] %v1531, 128
        %v1548 = vpop.trf.xlu0
        %v1549 = vpop.trf.xlu0
        %v1550 = vpop.trf.xlu0
        %v1551 = vpop.trf.xlu0
        %v1552 = vpop.trf.xlu0
        %v1553 = vpop.trf.xlu0
        %v1554 = vpop.trf.xlu0
        %v1555 = vpop.trf.xlu0
        %v1556 = vpop.trf.xlu0
        %v1557 = vpop.trf.xlu0
        %v1558 = vpop.trf.xlu0
        %v1559 = vpop.trf.xlu0
        %v1560 = vpop.trf.xlu0
        %v1561 = vpop.trf.xlu0
        %v1562 = vpop.trf.xlu0
        %v1563 = vpop.trf.xlu0
        %1564 = vst [vmem:[%s187] sm:$0xff] %v1548
        %1565 = vst [vmem:[%s187 + $0x8] sm:$0xff] %v1549
        %1566 = vst [vmem:[%s187 + $0x10] sm:$0xff] %v1550
        %1567 = vst [vmem:[%s187 + $0x18] sm:$0xff] %v1551
        %1568 = vst [vmem:[%s187 + $0x20] sm:$0xff] %v1552
        %1569 = vst [vmem:[%s187 + $0x28] sm:$0xff] %v1553
        %1570 = vst [vmem:[%s187 + $0x30] sm:$0xff] %v1554
        %1571 = vst [vmem:[%s187 + $0x38] sm:$0xff] %v1555
        %1572 = vst [vmem:[%s187 + $0x40] sm:$0xff] %v1556
        %1573 = vst [vmem:[%s187 + $0x48] sm:$0xff] %v1557
        %1574 = vst [vmem:[%s187 + $0x50] sm:$0xff] %v1558
        %1575 = vst [vmem:[%s187 + $0x58] sm:$0xff] %v1559
        %1576 = vst [vmem:[%s187 + $0x60] sm:$0xff] %v1560
        %1577 = vst [vmem:[%s187 + $0x68] sm:$0xff] %v1561
        %1578 = vst [vmem:[%s187 + $0x70] sm:$0xff] %v1562
        %1579 = vst [vmem:[%s187 + $0x78] sm:$0xff] %v1563
        %s1580 = sand.u32 %s109, 1
        %s1581 = scalar_lea.sflag [#allocation3], %s1580
        %s1582 = sand.u32 %s109, 1
        %s1583 = smul.addr %s1582, 128
        %s1584 = scalar_lea.vmem [#allocation2], %s1583
        // Predicated region
        $region33: #{tpu_custom_call.1} parent=31 // pred_check
          %p1585 = pneg %p119
        $region34: #{tpu_custom_call.1} parent=31 // pred_check_branch
          %1587 = sbr.rel (%p1585) target = $region36
        $region35: #{tpu_custom_call.1} parent=31 // pred_region
          %s1589 = ssub.s32 2048, 2048
          %1590 = vsyncadd %s1581, %s1589
          %s1591 = smul.addr %s21, 16
          %s1592 = sadd.s32 %s22, %s1591
          %s1593 = smul.addr %s1592, 128
          %s1594 = scalar_lea.hbm %s3, %s1593
          %s1595 = sshll.u32 %s1584, 4
          %s1596 = int_to_ptr.vmem [resolvable:$true] %s1595
          %1601 = dma.vmem_to_hbm [thread:$0]  %s1596, 2048, %s1594, %s1581, 128, 128, 8
        $region36: #{tpu_custom_call.1} parent=31 // pred_fallthru
          _
      $region32: #{tpu_custom_call.1} parent=5 // pred_fallthru
        _
      %p1602 = scmp.le.s32.totalorder 2, %s12
      // Predicated region
      $region37: #{tpu_custom_call.1} parent=5 // pred_check
        %p1603 = pneg %p1602
      $region38: #{tpu_custom_call.1} parent=5 // pred_check_branch
        %1605 = sbr.rel (%p1603) target = $region40
      $region39: #{tpu_custom_call.1} parent=5 // pred_region
        %s1606 = ssub.s32 %s12, 2
        // Predicated region
        $region41: #{tpu_custom_call.1} parent=39 // pred_check
          %p1607 = pneg %p125
        $region42: #{tpu_custom_call.1} parent=39 // pred_check_branch
          %1609 = sbr.rel (%p1607) target = $region44
        $region43: #{tpu_custom_call.1} parent=39 // pred_region
          %s1610 = sand.u32 %s110, 1
          %s1611 = scalar_lea.sflag [#allocation3], %s1610
          %s1612 = sand.u32 %s110, 1
          %s1613 = smul.addr %s1612, 128
          %s1614 = scalar_lea.vmem [#allocation2], %s1613
          %1615 = dma.done %s1611, 2048
        $region44: #{tpu_custom_call.1} parent=39 // pred_fallthru
          _
      $region40: #{tpu_custom_call.1} parent=5 // pred_fallthru
        _
    $region6: #{tpu_custom_call.1} parent=1 // loop_footer
      %s16 = sadd.s32 1, %s12
    $region7: #{tpu_custom_call.1} parent=1 // loop_footer_branch
      %11 = sbr.rel target = $region3
    $region8: #{tpu_custom_call.1} parent=1 // loop_exit
      _
    %1616 = vsyncpa [#allocation3], 1
    %s1617 = scalar_lea.sflag [#allocation3], 1
    %1618 = vsyncpa %s1617, 1

</llo_original>
